<compile_context>
chip_gen: v6e
topology: v6e:2x2x1
jax: 0.10.0
libtpu: 0.0.40
codegen_flags: <defaults>
</compile_context>

<pallas_src>
import functools
import math

import jax
import jax.numpy as jnp
from jax.experimental import pallas as pl
from jax.experimental.pallas import tpu as pltpu


def _round_up(n, m):
    return ((n + m - 1) // m) * m


def _gelu_tanh(x):
    # tanh-approximation GELU; tanh lands on the (otherwise idle) EUP slot.
    c = 0.7978845608028654  # sqrt(2/pi)
    return 0.5 * x * (1.0 + jnp.tanh(c * (x + 0.044715 * x * x * x)))


# -----------------------------------------------------------------------------
# fused kernel: conv stem (in-VMEM im2col) + GAP accumulator + neck FFN + heads
# -----------------------------------------------------------------------------
def _fused_kernel(x2_ref, f_ref, wc_ref, bc_ref,
                  w1a_ref, w1b_ref, b1_ref, w2_ref, b2_ref,
                  wh_ref, bh_ref, o_ref, acc_ref,
                  *, tile_m, img_w, inv_hw, aligned):
    t = pl.program_id(1)

    @pl.when(t == 0)
    def _init():
        acc_ref[...] = jnp.zeros_like(acc_ref)

    # --- 3x3 conv stem on this row tile --------------------------------------
    # x2_ref holds the whole ((H+2)*W, 3*Cin) kw-expanded image of this batch
    # element; the three kh taps are row-shifted slices, each one bf16 MXU
    # matmul accumulated in f32.
    m0 = t * tile_m
    f_pad = acc_ref.shape[1]
    conv = jnp.zeros((tile_m, f_pad), jnp.float32)
    for kh in range(3):
        start = m0 + kh * img_w
        if aligned:
            start = pl.multiple_of(start, 8)
        slab = x2_ref[pl.ds(start, tile_m), :]                 # (TILE_M, 3*Cin) bf16
        conv += jnp.dot(slab, wc_ref[kh], preferred_element_type=jnp.float32)
    y = _gelu_tanh(conv + bc_ref[...])                         # f32, lane-dense

    # --- global-average-pool accumulation (row-sum into per-batch scratch) ---
    acc_ref[...] += jnp.sum(y, axis=0, keepdims=True)

    # --- finalize once per batch element: neck FFN + fused heads -------------
    @pl.when(t == pl.num_programs(1) - 1)
    def _finalize():
        enc = acc_ref[...] * inv_hw                            # (1, F_pad) f32
        h = (jnp.dot(enc.astype(jnp.bfloat16), w1a_ref[...],
                     preferred_element_type=jnp.float32)
             + jnp.dot(f_ref[...].astype(jnp.bfloat16), w1b_ref[...],
                       preferred_element_type=jnp.float32)
             + b1_ref[...])
        h = _gelu_tanh(h)
        x = jnp.dot(h.astype(jnp.bfloat16), w2_ref[...],
                    preferred_element_type=jnp.float32) + b2_ref[...]
        o_ref[...] = (jnp.dot(x.astype(jnp.bfloat16), wh_ref[...],
                              preferred_element_type=jnp.float32)
                      + bh_ref[...])


# -----------------------------------------------------------------------------
# glue: cheap kw-expansion, parameter init, full forward, pure-JAX reference
# -----------------------------------------------------------------------------
def _build_conv_rows(x_nchw):
    """kw-expanded, H/W-padded image rows: (B, (H+2)*W, 3*Cin)."""
    b, cin, h, w = x_nchw.shape
    x = jnp.transpose(x_nchw, (0, 2, 3, 1))                    # NHWC
    xp = jnp.pad(x, ((0, 0), (1, 1), (1, 1), (0, 0)))          # (B, H+2, W+2, C)
    taps = [xp[:, :, kw:kw + w, :] for kw in range(3)]         # 3 x (B, H+2, W, C)
    rows = jnp.concatenate(taps, axis=-1)                      # (B, H+2, W, 3C)
    return rows.reshape(b, (h + 2) * w, 3 * cin), b, h, w, cin


def init_params(key, in_chans, in_features, n_features):
    def linear(k, fan_in, fan_out):
        kw, kb = jax.random.split(k)
        bound = 1.0 / math.sqrt(fan_in)
        w = jax.random.uniform(kw, (fan_in, fan_out), jnp.float32, -bound, bound)
        b = jax.random.uniform(kb, (1, fan_out), jnp.float32, -bound, bound)
        return w, b

    ks = jax.random.split(key, 7)
    p = {}
    p["w_conv"], p["b_conv"] = linear(ks[0], 9 * in_chans, n_features)           # encoder stem
    p["w1"], p["b1"] = linear(ks[1], n_features + in_features, n_features // 2)  # neck.fc1
    p["w2"], p["b2"] = linear(ks[2], n_features // 2, n_features)                # neck.fc2
    p["wfc"], p["bfc"] = linear(ks[3], n_features, 18)                           # fc
    p["wa1"], p["ba1"] = linear(ks[4], n_features, 4)                            # fc_aux1
    p["wbl"], p["bbl"] = linear(ks[5], n_features, 2)                            # fc_aux_cls_blinker
    p["wbr"], p["bbr"] = linear(ks[6], n_features, 1)                            # fc_aux_cls_brake
    return p


def atma18_forward(x_nchw, features, params, *, tile_m=512):
    rows, b, h, w, cin = _build_conv_rows(x_nchw)
    hw = h * w
    tile_m = min(tile_m, hw)
    assert hw % tile_m == 0, "tile_m must divide H*W"
    aligned = (w % 8 == 0) and (tile_m % 8 == 0)

    n_features = params["w_conv"].shape[1]
    hidden = params["w1"].shape[1]
    in_features = features.shape[1]
    k3 = 3 * cin
    rp = (h + 2) * w

    f_pad = _round_up(n_features, 128)
    h_pad = _round_up(hidden, 128)
    o_pad = 128
    n_heads = 18 + 4 + 2 + 1

    # ---- bf16, lane-dense parameter plumbing (cheap, once per call) ---------
    bf = jnp.bfloat16
    rows_bf = rows.astype(bf)
    w_conv = params["w_conv"].reshape(3, k3, n_features)
    w_conv = jnp.pad(w_conv, ((0, 0), (0, 0), (0, f_pad - n_features))).astype(bf)
    b_conv = jnp.pad(params["b_conv"], ((0, 0), (0, f_pad - n_features)))

    w1a = jnp.pad(params["w1"][:n_features],
                  ((0, f_pad - n_features), (0, h_pad - hidden))).astype(bf)
    w1b = jnp.pad(params["w1"][n_features:], ((0, 0), (0, h_pad - hidden))).astype(bf)
    b1 = jnp.pad(params["b1"], ((0, 0), (0, h_pad - hidden)))
    w2 = jnp.pad(params["w2"],
                 ((0, h_pad - hidden), (0, f_pad - n_features))).astype(bf)
    b2 = jnp.pad(params["b2"], ((0, 0), (0, f_pad - n_features)))

    w_heads = jnp.concatenate(
        [params["wfc"], params["wa1"], params["wbl"], params["wbr"]], axis=1)     # (F, 25)
    b_heads = jnp.concatenate(
        [params["bfc"], params["ba1"], params["bbl"], params["bbr"]], axis=1)     # (1, 25)
    w_heads = jnp.pad(w_heads, ((0, f_pad - n_features), (0, o_pad - n_heads))).astype(bf)
    b_heads = jnp.pad(b_heads, ((0, 0), (0, o_pad - n_heads)))

    features3 = features.reshape(b, 1, in_features)

    # ---- grid + BlockSpecs ---------------------------------------------------
    grid = (b, hw // tile_m)

    def const_spec(arr):  # whole array VMEM-resident across the grid
        return pl.BlockSpec(arr.shape, lambda bi, ti, _z=(0,) * arr.ndim: _z)

    in_specs = [
        pl.BlockSpec((None, rp, k3), lambda bi, ti: (bi, 0, 0)),           # image rows
        pl.BlockSpec((None, 1, in_features), lambda bi, ti: (bi, 0, 0)),   # tabular feats
        const_spec(w_conv), const_spec(b_conv),
        const_spec(w1a), const_spec(w1b), const_spec(b1),
        const_spec(w2), const_spec(b2),
        const_spec(w_heads), const_spec(b_heads),
    ]
    out_spec = pl.BlockSpec((None, 1, o_pad), lambda bi, ti: (bi, 0, 0))

    kernel = functools.partial(
        _fused_kernel, tile_m=tile_m, img_w=w, inv_hw=1.0 / hw, aligned=aligned)

    # advisory cost estimate (true algorithmic dims, not padded ones)
    flops = 2 * b * (hw * (9 * cin) * n_features
                     + n_features * hidden + in_features * hidden
                     + hidden * n_features + n_features * n_heads)
    transcendentals = b * (hw * n_features + hidden)           # one tanh per GELU elem
    args = (rows_bf, features3, w_conv, b_conv, w1a, w1b, b1, w2, b2,
            w_heads, b_heads)
    bytes_accessed = sum(int(a.size) * a.dtype.itemsize for a in args) + b * o_pad * 4

    out = pl.pallas_call(
        kernel,
        out_shape=jax.ShapeDtypeStruct((b, 1, o_pad), jnp.float32),
        grid=grid,
        in_specs=in_specs,
        out_specs=out_spec,
        scratch_shapes=[pltpu.VMEM((1, f_pad), jnp.float32)],   # per-batch GAP accumulator
        compiler_params=pltpu.CompilerParams(
            dimension_semantics=("parallel", "arbitrary"),
            vmem_limit_bytes=32 * 1024 * 1024),
        cost_estimate=pl.CostEstimate(
            flops=flops, transcendentals=transcendentals,
            bytes_accessed=bytes_accessed),
    )(*args)

    out = out[:, 0, :]
    return {
        "logits": out[:, :18],
        "logits_aux1": out[:, 18:22],
        "logits_aux_cls_blinker": out[:, 22:24],
        "logits_aux_cls_brake": out[:, 24:25],
    }


# -----------------------------------------------------------------------------
# pure-JAX f32 reference (exact erf GELU), for validation only
# -----------------------------------------------------------------------------
def _im2col_3x3(x_nchw):
    b, cin, h, w = x_nchw.shape
    x = jnp.transpose(x_nchw, (0, 2, 3, 1))
    xp = jnp.pad(x, ((0, 0), (1, 1), (1, 1), (0, 0)))
    patches = jnp.stack(
        [xp[:, kh:kh + h, kw:kw + w, :] for kh in range(3) for kw in range(3)],
        axis=3)                                                 # (B, H, W, 9, Cin)
    return patches.reshape(b, h * w, 9 * cin)


def reference_forward(x_nchw, features, params):
    patches = _im2col_3x3(x_nchw)
    y = jax.nn.gelu(patches @ params["w_conv"] + params["b_conv"], approximate=False)
    enc = jnp.mean(y, axis=1)
    z = jnp.concatenate([enc, features], axis=1)
    hdn = jax.nn.gelu(z @ params["w1"] + params["b1"], approximate=False)
    x = hdn @ params["w2"] + params["b2"]
    return {
        "logits": x @ params["wfc"] + params["bfc"],
        "logits_aux1": x @ params["wa1"] + params["ba1"],
        "logits_aux_cls_blinker": x @ params["wbl"] + params["bbl"],
        "logits_aux_cls_brake": x @ params["wbr"] + params["bbr"],
    }


if __name__ == "__main__":
    key = jax.random.PRNGKey(0)
    k_x, k_f, k_p = jax.random.split(key, 3)

    B, CIN, H, W = 2, 9, 16, 16       # encoder input: 9-channel image
    IN_FEATURES = 8                   # extra tabular features
    N_FEATURES = 32                   # encoder.num_features (synthetic)

    x = jax.random.normal(k_x, (B, CIN, H, W), jnp.float32)
    features = jax.random.normal(k_f, (B, IN_FEATURES), jnp.float32)
    params = init_params(k_p, CIN, IN_FEATURES, N_FEATURES)

    # tile_m=128 -> 2 row tiles per batch element, exercising the accumulator path
    out = atma18_forward(x, features, params, tile_m=128)
    out = jax.block_until_ready(out)

    ref = reference_forward(x, features, params)
    # tolerance accounts for bf16 matmul inputs + tanh-GELU vs exact-erf GELU
    for name in ("logits", "logits_aux1", "logits_aux_cls_blinker", "logits_aux_cls_brake"):
        assert out[name].shape == ref[name].shape, name
        assert jnp.allclose(out[name], ref[name], atol=2e-2, rtol=2e-2), name

    print("KERNEL_OK")
</pallas_src>

<mosaic_0001>
module attributes {stable_mosaic.version = 11 : i64} {
  func.func @_fused_kernel(%arg0: i32, %arg1: i32, %arg2: memref<1x288x27xbf16, #tpu.memory_space<vmem>>, %arg3: memref<1x1x8xf32, #tpu.memory_space<vmem>>, %arg4: memref<3x27x128xbf16, #tpu.memory_space<vmem>>, %arg5: memref<1x128xf32, #tpu.memory_space<vmem>>, %arg6: memref<128x128xbf16, #tpu.memory_space<vmem>>, %arg7: memref<8x128xbf16, #tpu.memory_space<vmem>>, %arg8: memref<1x128xf32, #tpu.memory_space<vmem>>, %arg9: memref<128x128xbf16, #tpu.memory_space<vmem>>, %arg10: memref<1x128xf32, #tpu.memory_space<vmem>>, %arg11: memref<128x128xbf16, #tpu.memory_space<vmem>>, %arg12: memref<1x128xf32, #tpu.memory_space<vmem>>, %arg13: memref<1x1x128xf32, #tpu.memory_space<vmem>>, %arg14: memref<1x128xf32, #tpu.memory_space<vmem>>) attributes {dimension_semantics = [#tpu.dimension_semantics<parallel>, #tpu.dimension_semantics<arbitrary>], iteration_bounds = array<i64: 2, 2>, scalar_prefetch = 0 : i64, scratch_operands = 1 : i64, tpu.core_type = #tpu.core_type<tc>, window_params = [{transform_indices = @transform_0, window_bounds = array<i64: 1, 288, 27>}, {transform_indices = @transform_1, window_bounds = array<i64: 1, 1, 8>}, {pipeline_mode = #tpu.pipeline_mode<synchronous>, transform_indices = @transform_2, window_bounds = array<i64: 3, 27, 128>}, {pipeline_mode = #tpu.pipeline_mode<synchronous>, transform_indices = @transform_3, window_bounds = array<i64: 1, 128>}, {pipeline_mode = #tpu.pipeline_mode<synchronous>, transform_indices = @transform_4, window_bounds = array<i64: 128, 128>}, {pipeline_mode = #tpu.pipeline_mode<synchronous>, transform_indices = @transform_5, window_bounds = array<i64: 8, 128>}, {pipeline_mode = #tpu.pipeline_mode<synchronous>, transform_indices = @transform_6, window_bounds = array<i64: 1, 128>}, {pipeline_mode = #tpu.pipeline_mode<synchronous>, transform_indices = @transform_7, window_bounds = array<i64: 128, 128>}, {pipeline_mode = #tpu.pipeline_mode<synchronous>, transform_indices = @transform_8, window_bounds = array<i64: 1, 128>}, {pipeline_mode = #tpu.pipeline_mode<synchronous>, transform_indices = @transform_9, window_bounds = array<i64: 128, 128>}, {pipeline_mode = #tpu.pipeline_mode<synchronous>, transform_indices = @transform_10, window_bounds = array<i64: 1, 128>}, {transform_indices = @transform_11, window_bounds = array<i64: 1, 1, 128>}]} {
    %c0_i32 = arith.constant 0 : i32
    %0 = arith.cmpi eq, %arg1, %c0_i32 : i32
    %1 = arith.extui %0 : i1 to i32
    %c0_i32_0 = arith.constant 0 : i32
    %2 = arith.cmpi ne, %1, %c0_i32_0 : i32
    scf.if %2 {
      %cst_29 = arith.constant 0.000000e+00 : f32
      %56 = vector.broadcast %cst_29 : f32 to vector<1x128xf32>
      %c0_30 = arith.constant 0 : index
      %c0_31 = arith.constant 0 : index
      %57 = vector.load %arg14[%c0_30, %c0_31] : memref<1x128xf32, #tpu.memory_space<vmem>>, vector<1x128xf32>
      tpu.vector_store %arg14[%c0_30, %c0_31], %56 {strides = array<i32>} : memref<1x128xf32, #tpu.memory_space<vmem>>, vector<1x128xf32>,
    } else {
    }
    %c128_i32 = arith.constant 128 : i32
    %3 = arith.muli %arg1, %c128_i32 : i32
    %cst = arith.constant 0.000000e+00 : f32
    %4 = vector.broadcast %cst : f32 to vector<128x128xf32>
    %c0_i32_1 = arith.constant 0 : i32
    %5 = arith.addi %3, %c0_i32_1 : i32
    %6 = tpu.assume_multiple %5, 8 : i32
    %c0 = arith.constant 0 : index
    %7 = arith.index_cast %6 : i32 to index
    %c0_2 = arith.constant 0 : index
    %8 = vector.load %arg2[%c0, %7, %c0_2] : memref<1x288x27xbf16, #tpu.memory_space<vmem>>, vector<1x128x27xbf16>
    %9 = vector.shape_cast %8 : vector<1x128x27xbf16> to vector<128x27xbf16>
    %c0_3 = arith.constant 0 : index
    %c0_4 = arith.constant 0 : index
    %c0_5 = arith.constant 0 : index
    %10 = vector.load %arg4[%c0_3, %c0_4, %c0_5] : memref<3x27x128xbf16, #tpu.memory_space<vmem>>, vector<1x27x128xbf16>
    %11 = vector.shape_cast %10 : vector<1x27x128xbf16> to vector<27x128xbf16>
    %cst_6 = arith.constant dense<0.000000e+00> : vector<128x128xf32>
    %12 = tpu.matmul %9, %11, %cst_6 {dimension_numbers = #tpu.dot_dimension_numbers<[1], [0], [0], [1], [0, 0, 1, 1], [], []>} : vector<128x27xbf16>, vector<27x128xbf16>, vector<128x128xf32> -> vector<128x128xf32>
    %13 = arith.addf %4, %12 : vector<128x128xf32>
    %c16_i32 = arith.constant 16 : i32
    %14 = arith.addi %3, %c16_i32 : i32
    %15 = tpu.assume_multiple %14, 8 : i32
    %c0_7 = arith.constant 0 : index
    %16 = arith.index_cast %15 : i32 to index
    %c0_8 = arith.constant 0 : index
    %17 = vector.load %arg2[%c0_7, %16, %c0_8] : memref<1x288x27xbf16, #tpu.memory_space<vmem>>, vector<1x128x27xbf16>
    %18 = vector.shape_cast %17 : vector<1x128x27xbf16> to vector<128x27xbf16>
    %c1 = arith.constant 1 : index
    %c0_9 = arith.constant 0 : index
    %c0_10 = arith.constant 0 : index
    %19 = vector.load %arg4[%c1, %c0_9, %c0_10] : memref<3x27x128xbf16, #tpu.memory_space<vmem>>, vector<1x27x128xbf16>
    %20 = vector.shape_cast %19 : vector<1x27x128xbf16> to vector<27x128xbf16>
    %cst_11 = arith.constant dense<0.000000e+00> : vector<128x128xf32>
    %21 = tpu.matmul %18, %20, %cst_11 {dimension_numbers = #tpu.dot_dimension_numbers<[1], [0], [0], [1], [0, 0, 1, 1], [], []>} : vector<128x27xbf16>, vector<27x128xbf16>, vector<128x128xf32> -> vector<128x128xf32>
    %22 = arith.addf %13, %21 : vector<128x128xf32>
    %c32_i32 = arith.constant 32 : i32
    %23 = arith.addi %3, %c32_i32 : i32
    %24 = tpu.assume_multiple %23, 8 : i32
    %c0_12 = arith.constant 0 : index
    %25 = arith.index_cast %24 : i32 to index
    %c0_13 = arith.constant 0 : index
    %26 = vector.load %arg2[%c0_12, %25, %c0_13] : memref<1x288x27xbf16, #tpu.memory_space<vmem>>, vector<1x128x27xbf16>
    %27 = vector.shape_cast %26 : vector<1x128x27xbf16> to vector<128x27xbf16>
    %c2 = arith.constant 2 : index
    %c0_14 = arith.constant 0 : index
    %c0_15 = arith.constant 0 : index
    %28 = vector.load %arg4[%c2, %c0_14, %c0_15] : memref<3x27x128xbf16, #tpu.memory_space<vmem>>, vector<1x27x128xbf16>
    %29 = vector.shape_cast %28 : vector<1x27x128xbf16> to vector<27x128xbf16>
    %cst_16 = arith.constant dense<0.000000e+00> : vector<128x128xf32>
    %30 = tpu.matmul %27, %29, %cst_16 {dimension_numbers = #tpu.dot_dimension_numbers<[1], [0], [0], [1], [0, 0, 1, 1], [], []>} : vector<128x27xbf16>, vector<27x128xbf16>, vector<128x128xf32> -> vector<128x128xf32>
    %31 = arith.addf %22, %30 : vector<128x128xf32>
    %c0_17 = arith.constant 0 : index
    %c0_18 = arith.constant 0 : index
    %32 = vector.load %arg5[%c0_17, %c0_18] : memref<1x128xf32, #tpu.memory_space<vmem>>, vector<1x128xf32>
    %33 = vector.broadcast %32 : vector<1x128xf32> to vector<128x128xf32>
    %34 = arith.addf %31, %33 : vector<128x128xf32>
    %cst_19 = arith.constant 5.000000e-01 : f32
    %35 = vector.broadcast %cst_19 : f32 to vector<128x128xf32>
    %36 = arith.mulf %35, %34 : vector<128x128xf32>
    %cst_20 = arith.constant 4.471500e-02 : f32
    %37 = vector.broadcast %cst_20 : f32 to vector<128x128xf32>
    %38 = arith.mulf %37, %34 : vector<128x128xf32>
    %39 = arith.mulf %38, %34 : vector<128x128xf32>
    %40 = arith.mulf %39, %34 : vector<128x128xf32>
    %41 = arith.addf %34, %40 : vector<128x128xf32>
    %cst_21 = arith.constant 0.797884583 : f32
    %42 = vector.broadcast %cst_21 : f32 to vector<128x128xf32>
    %43 = arith.mulf %42, %41 : vector<128x128xf32>
    %44 = math.tanh %43 : vector<128x128xf32>
    %cst_22 = arith.constant 1.000000e+00 : f32
    %45 = vector.broadcast %cst_22 : f32 to vector<128x128xf32>
    %46 = arith.addf %45, %44 : vector<128x128xf32>
    %47 = arith.mulf %36, %46 : vector<128x128xf32>
    %c0_23 = arith.constant 0 : index
    %c0_24 = arith.constant 0 : index
    %48 = vector.load %arg14[%c0_23, %c0_24] : memref<1x128xf32, #tpu.memory_space<vmem>>, vector<1x128xf32>
    %cst_25 = arith.constant dense<0.000000e+00> : vector<128xf32>
    %49 = vector.multi_reduction <add>, %47, %cst_25 [0] : vector<128x128xf32> to vector<128xf32>
    %50 = vector.shape_cast %49 : vector<128xf32> to vector<1x128xf32>
    %51 = arith.addf %48, %50 : vector<1x128xf32>
    %c0_26 = arith.constant 0 : index
    %c0_27 = arith.constant 0 : index
    %52 = vector.load %arg14[%c0_26, %c0_27] : memref<1x128xf32, #tpu.memory_space<vmem>>, vector<1x128xf32>
    tpu.vector_store %arg14[%c0_26, %c0_27], %51 {strides = array<i32>} : memref<1x128xf32, #tpu.memory_space<vmem>>, vector<1x128xf32>,
    %c1_i32 = arith.constant 1 : i32
    %53 = arith.cmpi eq, %arg1, %c1_i32 : i32
    %54 = arith.extui %53 : i1 to i32
    %c0_i32_28 = arith.constant 0 : i32
    %55 = arith.cmpi ne, %54, %c0_i32_28 : i32
    scf.if %55 {
      %c0_29 = arith.constant 0 : index
      %c0_30 = arith.constant 0 : index
      %56 = vector.load %arg14[%c0_29, %c0_30] : memref<1x128xf32, #tpu.memory_space<vmem>>, vector<1x128xf32>
      %cst_31 = arith.constant 3.906250e-03 : f32
      %57 = vector.broadcast %cst_31 : f32 to vector<1x128xf32>
      %58 = arith.mulf %56, %57 : vector<1x128xf32>
      %59 = arith.truncf %58 : vector<1x128xf32> to vector<1x128xbf16>
      %c0_32 = arith.constant 0 : index
      %c0_33 = arith.constant 0 : index
      %60 = vector.load %arg6[%c0_32, %c0_33] : memref<128x128xbf16, #tpu.memory_space<vmem>>, vector<128x128xbf16>
      %cst_34 = arith.constant dense<0.000000e+00> : vector<1x128xf32>
      %61 = tpu.matmul %59, %60, %cst_34 {dimension_numbers = #tpu.dot_dimension_numbers<[1], [0], [0], [1], [0, 0, 1, 1], [], []>} : vector<1x128xbf16>, vector<128x128xbf16>, vector<1x128xf32> -> vector<1x128xf32>
      %c0_35 = arith.constant 0 : index
      %c0_36 = arith.constant 0 : index
      %c0_37 = arith.constant 0 : index
      %62 = vector.load %arg3[%c0_35, %c0_36, %c0_37] : memref<1x1x8xf32, #tpu.memory_space<vmem>>, vector<1x1x8xf32>
      %63 = vector.shape_cast %62 : vector<1x1x8xf32> to vector<1x8xf32>
      %64 = arith.truncf %63 : vector<1x8xf32> to vector<1x8xbf16>
      %c0_38 = arith.constant 0 : index
      %c0_39 = arith.constant 0 : index
      %65 = vector.load %arg7[%c0_38, %c0_39] : memref<8x128xbf16, #tpu.memory_space<vmem>>, vector<8x128xbf16>
      %cst_40 = arith.constant dense<0.000000e+00> : vector<1x128xf32>
      %66 = tpu.matmul %64, %65, %cst_40 {dimension_numbers = #tpu.dot_dimension_numbers<[1], [0], [0], [1], [0, 0, 1, 1], [], []>} : vector<1x8xbf16>, vector<8x128xbf16>, vector<1x128xf32> -> vector<1x128xf32>
      %67 = arith.addf %61, %66 : vector<1x128xf32>
      %c0_41 = arith.constant 0 : index
      %c0_42 = arith.constant 0 : index
      %68 = vector.load %arg8[%c0_41, %c0_42] : memref<1x128xf32, #tpu.memory_space<vmem>>, vector<1x128xf32>
      %69 = arith.addf %67, %68 : vector<1x128xf32>
      %cst_43 = arith.constant 5.000000e-01 : f32
      %70 = vector.broadcast %cst_43 : f32 to vector<1x128xf32>
      %71 = arith.mulf %70, %69 : vector<1x128xf32>
      %cst_44 = arith.constant 4.471500e-02 : f32
      %72 = vector.broadcast %cst_44 : f32 to vector<1x128xf32>
      %73 = arith.mulf %72, %69 : vector<1x128xf32>
      %74 = arith.mulf %73, %69 : vector<1x128xf32>
      %75 = arith.mulf %74, %69 : vector<1x128xf32>
      %76 = arith.addf %69, %75 : vector<1x128xf32>
      %cst_45 = arith.constant 0.797884583 : f32
      %77 = vector.broadcast %cst_45 : f32 to vector<1x128xf32>
      %78 = arith.mulf %77, %76 : vector<1x128xf32>
      %79 = math.tanh %78 : vector<1x128xf32>
      %cst_46 = arith.constant 1.000000e+00 : f32
      %80 = vector.broadcast %cst_46 : f32 to vector<1x128xf32>
      %81 = arith.addf %80, %79 : vector<1x128xf32>
      %82 = arith.mulf %71, %81 : vector<1x128xf32>
      %83 = arith.truncf %82 : vector<1x128xf32> to vector<1x128xbf16>
      %c0_47 = arith.constant 0 : index
      %c0_48 = arith.constant 0 : index
      %84 = vector.load %arg9[%c0_47, %c0_48] : memref<128x128xbf16, #tpu.memory_space<vmem>>, vector<128x128xbf16>
      %cst_49 = arith.constant dense<0.000000e+00> : vector<1x128xf32>
      %85 = tpu.matmul %83, %84, %cst_49 {dimension_numbers = #tpu.dot_dimension_numbers<[1], [0], [0], [1], [0, 0, 1, 1], [], []>} : vector<1x128xbf16>, vector<128x128xbf16>, vector<1x128xf32> -> vector<1x128xf32>
      %c0_50 = arith.constant 0 : index
      %c0_51 = arith.constant 0 : index
      %86 = vector.load %arg10[%c0_50, %c0_51] : memref<1x128xf32, #tpu.memory_space<vmem>>, vector<1x128xf32>
      %87 = arith.addf %85, %86 : vector<1x128xf32>
      %88 = arith.truncf %87 : vector<1x128xf32> to vector<1x128xbf16>
      %c0_52 = arith.constant 0 : index
      %c0_53 = arith.constant 0 : index
      %89 = vector.load %arg11[%c0_52, %c0_53] : memref<128x128xbf16, #tpu.memory_space<vmem>>, vector<128x128xbf16>
      %cst_54 = arith.constant dense<0.000000e+00> : vector<1x128xf32>
      %90 = tpu.matmul %88, %89, %cst_54 {dimension_numbers = #tpu.dot_dimension_numbers<[1], [0], [0], [1], [0, 0, 1, 1], [], []>} : vector<1x128xbf16>, vector<128x128xbf16>, vector<1x128xf32> -> vector<1x128xf32>
      %c0_55 = arith.constant 0 : index
      %c0_56 = arith.constant 0 : index
      %91 = vector.load %arg12[%c0_55, %c0_56] : memref<1x128xf32, #tpu.memory_space<vmem>>, vector<1x128xf32>
      %92 = arith.addf %90, %91 : vector<1x128xf32>
      %c0_57 = arith.constant 0 : index
      %c0_58 = arith.constant 0 : index
      %c0_59 = arith.constant 0 : index
      %93 = vector.load %arg13[%c0_57, %c0_58, %c0_59] : memref<1x1x128xf32, #tpu.memory_space<vmem>>, vector<1x1x128xf32>
      %94 = vector.shape_cast %93 : vector<1x1x128xf32> to vector<1x128xf32>
      %95 = vector.shape_cast %92 : vector<1x128xf32> to vector<1x1x128xf32>
      tpu.vector_store %arg13[%c0_57, %c0_58, %c0_59], %95 {strides = array<i32>} : memref<1x1x128xf32, #tpu.memory_space<vmem>>, vector<1x1x128xf32>,
    } else {
    }
    return
  }
  func.func @transform_0(%arg0: i32, %arg1: i32) -> (i32, i32, i32) {
    %c0_i32 = arith.constant 0 : i32
    %c0_i32_0 = arith.constant 0 : i32
    %c0_i32_1 = arith.constant 0 : i32
    return %arg0, %c0_i32, %c0_i32_0 : i32, i32, i32
  }
  func.func @transform_1(%arg0: i32, %arg1: i32) -> (i32, i32, i32) {
    %c0_i32 = arith.constant 0 : i32
    %c0_i32_0 = arith.constant 0 : i32
    %c0_i32_1 = arith.constant 0 : i32
    return %arg0, %c0_i32, %c0_i32_0 : i32, i32, i32
  }
  func.func @transform_2(%arg0: i32, %arg1: i32) -> (i32, i32, i32) {
    %c0_i32 = arith.constant 0 : i32
    %c0_i32_0 = arith.constant 0 : i32
    %c0_i32_1 = arith.constant 0 : i32
    %c0_i32_2 = arith.constant 0 : i32
    return %c0_i32, %c0_i32_0, %c0_i32_1 : i32, i32, i32
  }
  func.func @transform_3(%arg0: i32, %arg1: i32) -> (i32, i32) {
    %c0_i32 = arith.constant 0 : i32
    %c0_i32_0 = arith.constant 0 : i32
    %c0_i32_1 = arith.constant 0 : i32
    return %c0_i32, %c0_i32_0 : i32, i32
  }
  func.func @transform_4(%arg0: i32, %arg1: i32) -> (i32, i32) {
    %c0_i32 = arith.constant 0 : i32
    %c0_i32_0 = arith.constant 0 : i32
    %c0_i32_1 = arith.constant 0 : i32
    return %c0_i32, %c0_i32_0 : i32, i32
  }
  func.func @transform_5(%arg0: i32, %arg1: i32) -> (i32, i32) {
    %c0_i32 = arith.constant 0 : i32
    %c0_i32_0 = arith.constant 0 : i32
    %c0_i32_1 = arith.constant 0 : i32
    return %c0_i32, %c0_i32_0 : i32, i32
  }
  func.func @transform_6(%arg0: i32, %arg1: i32) -> (i32, i32) {
    %c0_i32 = arith.constant 0 : i32
    %c0_i32_0 = arith.constant 0 : i32
    %c0_i32_1 = arith.constant 0 : i32
    return %c0_i32, %c0_i32_0 : i32, i32
  }
  func.func @transform_7(%arg0: i32, %arg1: i32) -> (i32, i32) {
    %c0_i32 = arith.constant 0 : i32
    %c0_i32_0 = arith.constant 0 : i32
    %c0_i32_1 = arith.constant 0 : i32
    return %c0_i32, %c0_i32_0 : i32, i32
  }
  func.func @transform_8(%arg0: i32, %arg1: i32) -> (i32, i32) {
    %c0_i32 = arith.constant 0 : i32
    %c0_i32_0 = arith.constant 0 : i32
    %c0_i32_1 = arith.constant 0 : i32
    return %c0_i32, %c0_i32_0 : i32, i32
  }
  func.func @transform_9(%arg0: i32, %arg1: i32) -> (i32, i32) {
    %c0_i32 = arith.constant 0 : i32
    %c0_i32_0 = arith.constant 0 : i32
    %c0_i32_1 = arith.constant 0 : i32
    return %c0_i32, %c0_i32_0 : i32, i32
  }
  func.func @transform_10(%arg0: i32, %arg1: i32) -> (i32, i32) {
    %c0_i32 = arith.constant 0 : i32
    %c0_i32_0 = arith.constant 0 : i32
    %c0_i32_1 = arith.constant 0 : i32
    return %c0_i32, %c0_i32_0 : i32, i32
  }
  func.func @transform_11(%arg0: i32, %arg1: i32) -> (i32, i32, i32) {
    %c0_i32 = arith.constant 0 : i32
    %c0_i32_0 = arith.constant 0 : i32
    %c0_i32_1 = arith.constant 0 : i32
    return %arg0, %c0_i32, %c0_i32_0 : i32, i32, i32
  }
}

</mosaic_0001>

<llo_original>
// kernel: tpu_custom_call.1
$region0: #{tpu_custom_call.1}
  #allocation0 [shape = 'u32[]', space=smem, size = 0x4, offset = 0x4, fixed_abs, tag = 'smem constant byte address 0x4 - core index']
  #allocation1 [shape = 'u32[144,128]{1,0:T(1,128)}', space=vmem, size = 0x12000, scoped, tag = 'internal scratch']
  #allocation2 [shape = 'f32[1,128]{1,0:T(1,128)}', space=vmem, size = 0x200, scoped, tag = 'scratch operand']
  %s0 = inlined_call_operand.vmem [shape: bf16[2,288,27], index: 0, kind: input, shape index: {}]
  %s1 = inlined_call_operand.vmem [shape: f32[2,1,8], index: 1, kind: input, shape index: {}]
  %s2 = inlined_call_operand.vmem [shape: bf16[3,27,128], index: 2, kind: input, shape index: {}]
  %s3 = inlined_call_operand.vmem [shape: f32[1,128], index: 3, kind: input, shape index: {}]
  %s4 = inlined_call_operand.vmem [shape: bf16[128,128], index: 4, kind: input, shape index: {}]
  %s5 = inlined_call_operand.vmem [shape: bf16[8,128], index: 5, kind: input, shape index: {}]
  %s6 = inlined_call_operand.vmem [shape: f32[1,128], index: 6, kind: input, shape index: {}]
  %s7 = inlined_call_operand.vmem [shape: bf16[128,128], index: 7, kind: input, shape index: {}]
  %s8 = inlined_call_operand.vmem [shape: f32[1,128], index: 8, kind: input, shape index: {}]
  %s9 = inlined_call_operand.vmem [shape: bf16[128,128], index: 9, kind: input, shape index: {}]
  %s10 = inlined_call_operand.vmem [shape: f32[1,128], index: 10, kind: input, shape index: {}]
  %s11 = inlined_call_operand.hbm [shape: f32[2,1,128], index: 11, kind: output, shape index: {}]
  %s12 = sld [smem:[#allocation0]]
  $region85: #{tpu_custom_call.1} parent=0
    _
  %s14 = ssub.s32 1, %s12
  %s15 = scalar_select 0, %s14, %s12
  $region1: #{tpu_custom_call.1} parent=0
    #allocation3 [shape = 'u8[1024]{0}', space=vmem, size = 0x400, scoped, tag = 'output window, operand 0']
    #allocation4 [shape = 's32[2]{0}', space=sflag, size = 0x8, scoped, tag = 'scoped memory for tpu_custom_call.1']
    %16 = vsyncpa [#allocation4], 0
    %s17 = scalar_lea.sflag [#allocation4], 1
    %18 = vsyncpa %s17, 0
    loop: start=0, step=1, limit=6
    $region2: #{tpu_custom_call.1} parent=1 // loop_pre_header
      _
    $region3: #{tpu_custom_call.1} parent=1 // loop_header
      %s20 = sphi 0, %s24
      %p21 = scmp.ge.s32.totalorder %s20, 6
      %s27 = sphi 0, %s39
      %s28 = sphi 0, %s35
      %s29 = sphi 0, %s27
      %s30 = sphi 0, %s28
      %s31 = sphi 0, %s29
      %s32 = sphi 0, %s30
      %s42 = sphi 0, %s44
      %s45 = sphi 0, %s42
      %s46 = sphi 0, %s45
      %s62 = sphi 0, %s46
      %s68 = sphi 0, %s70
      %s71 = sphi 0, %s68
      %s72 = sphi 0, %s71
      %s88 = sphi 0, %s72
      %s92 = sphi 0, %s92
      %s94 = sphi 0, %s92
      %s95 = sphi 0, %s94
      %s109 = sphi 0, %s95
      %s113 = sphi 0, %s113
      %s115 = sphi 0, %s113
      %s116 = sphi 0, %s115
      %s130 = sphi 0, %s116
      %s134 = sphi 0, %s134
      %s136 = sphi 0, %s134
      %s137 = sphi 0, %s136
      %s151 = sphi 0, %s137
      %s155 = sphi 0, %s155
      %s157 = sphi 0, %s155
      %s158 = sphi 0, %s157
      %s172 = sphi 0, %s158
      %s176 = sphi 0, %s176
      %s178 = sphi 0, %s176
      %s179 = sphi 0, %s178
      %s193 = sphi 0, %s179
      %s197 = sphi 0, %s197
      %s199 = sphi 0, %s197
      %s200 = sphi 0, %s199
      %s214 = sphi 0, %s200
      %s218 = sphi 0, %s218
      %s220 = sphi 0, %s218
      %s221 = sphi 0, %s220
      %s235 = sphi 0, %s221
      %s239 = sphi 0, %s239
      %s241 = sphi 0, %s239
      %s242 = sphi 0, %s241
      %s256 = sphi 0, %s242
      %s260 = sphi 0, %s260
      %s262 = sphi 0, %s260
      %s263 = sphi 0, %s262
      %s277 = sphi 0, %s263
      %s283 = sphi 0, %s285
      %s286 = sphi 0, %s283
      %s287 = sphi 0, %s286
      %s303 = sphi 0, %s287
    $region4: #{tpu_custom_call.1} parent=1 // loop_header_branch
      %23 = sbr.rel (%p21) target = $region8
    $region5: #{tpu_custom_call.1} parent=1 // loop_body
      %s25 = ssub.s32 %s20, 1
      %s26 = ssub.s32 %s20, 2
      %s33 = sadd.s32 1, %s28
      %p34 = scmp.ge.s32.totalorder %s33, 2
      %s35 = scalar_select %p34, 0, %s33
      %s36 = sadd.s32 1, %s27
      %s37 = scalar_select %p34, %s36, %s27
      %p38 = scmp.ge.s32.totalorder %s37, 2
      %s39 = scalar_select %p38, 0, %s37
      %s40 = ssub.s32 %s27, %s39
      %p41 = scmp.eq.s32.totalorder %s40, 0
      %s43 = sadd.s32 %s42, 1
      %s44 = scalar_select %p41, %s42, %s43
      %p47 = pneg %p41
      %p48 = scmp.eq.s32.totalorder %s20, 3
      %p49 = por %p47, %p48
      %p50 = scmp.ne.s32.totalorder %s42, %s45
      %p51 = scmp.eq.s32.totalorder %s20, 0
      %p52 = por %p50, %p51
      %p53 = scmp.ne.s32.totalorder %s42, %s45
      %p54 = scmp.eq.s32.totalorder %s25, 3
      %p55 = por %p53, %p54
      %p56 = scmp.ne.s32.totalorder %s45, %s46
      %p57 = scmp.eq.s32.totalorder %s25, 0
      %p58 = por %p56, %p57
      %p59 = scmp.ne.s32.totalorder %s45, %s46
      %p60 = scmp.eq.s32.totalorder %s26, 3
      %p61 = por %p59, %p60
      %p63 = scmp.ne.s32.totalorder %s46, %s62
      %p64 = scmp.eq.s32.totalorder %s26, 0
      %p65 = por %p63, %p64
      %s66 = ssub.s32 %s27, %s39
      %p67 = scmp.eq.s32.totalorder %s66, 0
      %s69 = sadd.s32 %s68, 1
      %s70 = scalar_select %p67, %s68, %s69
      %p73 = pneg %p67
      %p74 = scmp.eq.s32.totalorder %s20, 3
      %p75 = por %p73, %p74
      %p76 = scmp.ne.s32.totalorder %s68, %s71
      %p77 = scmp.eq.s32.totalorder %s20, 0
      %p78 = por %p76, %p77
      %p79 = scmp.ne.s32.totalorder %s68, %s71
      %p80 = scmp.eq.s32.totalorder %s25, 3
      %p81 = por %p79, %p80
      %p82 = scmp.ne.s32.totalorder %s71, %s72
      %p83 = scmp.eq.s32.totalorder %s25, 0
      %p84 = por %p82, %p83
      %p85 = scmp.ne.s32.totalorder %s71, %s72
      %p86 = scmp.eq.s32.totalorder %s26, 3
      %p87 = por %p85, %p86
      %p89 = scmp.ne.s32.totalorder %s72, %s88
      %p90 = scmp.eq.s32.totalorder %s26, 0
      %p91 = por %p89, %p90
      %s93 = sadd.s32 %s92, 1
      %p96 = scmp.eq.s32.totalorder %s20, 3
      %p97 = scmp.ne.s32.totalorder %s92, %s94
      %p98 = scmp.eq.s32.totalorder %s20, 0
      %p99 = por %p97, %p98
      %p100 = scmp.ne.s32.totalorder %s92, %s94
      %p101 = scmp.eq.s32.totalorder %s25, 3
      %p102 = por %p100, %p101
      %p103 = scmp.ne.s32.totalorder %s94, %s95
      %p104 = scmp.eq.s32.totalorder %s25, 0
      %p105 = por %p103, %p104
      %p106 = scmp.ne.s32.totalorder %s94, %s95
      %p107 = scmp.eq.s32.totalorder %s26, 3
      %p108 = por %p106, %p107
      %p110 = scmp.ne.s32.totalorder %s95, %s109
      %p111 = scmp.eq.s32.totalorder %s26, 0
      %p112 = por %p110, %p111
      %s114 = sadd.s32 %s113, 1
      %p117 = scmp.eq.s32.totalorder %s20, 3
      %p118 = scmp.ne.s32.totalorder %s113, %s115
      %p119 = scmp.eq.s32.totalorder %s20, 0
      %p120 = por %p118, %p119
      %p121 = scmp.ne.s32.totalorder %s113, %s115
      %p122 = scmp.eq.s32.totalorder %s25, 3
      %p123 = por %p121, %p122
      %p124 = scmp.ne.s32.totalorder %s115, %s116
      %p125 = scmp.eq.s32.totalorder %s25, 0
      %p126 = por %p124, %p125
      %p127 = scmp.ne.s32.totalorder %s115, %s116
      %p128 = scmp.eq.s32.totalorder %s26, 3
      %p129 = por %p127, %p128
      %p131 = scmp.ne.s32.totalorder %s116, %s130
      %p132 = scmp.eq.s32.totalorder %s26, 0
      %p133 = por %p131, %p132
      %s135 = sadd.s32 %s134, 1
      %p138 = scmp.eq.s32.totalorder %s20, 3
      %p139 = scmp.ne.s32.totalorder %s134, %s136
      %p140 = scmp.eq.s32.totalorder %s20, 0
      %p141 = por %p139, %p140
      %p142 = scmp.ne.s32.totalorder %s134, %s136
      %p143 = scmp.eq.s32.totalorder %s25, 3
      %p144 = por %p142, %p143
      %p145 = scmp.ne.s32.totalorder %s136, %s137
      %p146 = scmp.eq.s32.totalorder %s25, 0
      %p147 = por %p145, %p146
      %p148 = scmp.ne.s32.totalorder %s136, %s137
      %p149 = scmp.eq.s32.totalorder %s26, 3
      %p150 = por %p148, %p149
      %p152 = scmp.ne.s32.totalorder %s137, %s151
      %p153 = scmp.eq.s32.totalorder %s26, 0
      %p154 = por %p152, %p153
      %s156 = sadd.s32 %s155, 1
      %p159 = scmp.eq.s32.totalorder %s20, 3
      %p160 = scmp.ne.s32.totalorder %s155, %s157
      %p161 = scmp.eq.s32.totalorder %s20, 0
      %p162 = por %p160, %p161
      %p163 = scmp.ne.s32.totalorder %s155, %s157
      %p164 = scmp.eq.s32.totalorder %s25, 3
      %p165 = por %p163, %p164
      %p166 = scmp.ne.s32.totalorder %s157, %s158
      %p167 = scmp.eq.s32.totalorder %s25, 0
      %p168 = por %p166, %p167
      %p169 = scmp.ne.s32.totalorder %s157, %s158
      %p170 = scmp.eq.s32.totalorder %s26, 3
      %p171 = por %p169, %p170
      %p173 = scmp.ne.s32.totalorder %s158, %s172
      %p174 = scmp.eq.s32.totalorder %s26, 0
      %p175 = por %p173, %p174
      %s177 = sadd.s32 %s176, 1
      %p180 = scmp.eq.s32.totalorder %s20, 3
      %p181 = scmp.ne.s32.totalorder %s176, %s178
      %p182 = scmp.eq.s32.totalorder %s20, 0
      %p183 = por %p181, %p182
      %p184 = scmp.ne.s32.totalorder %s176, %s178
      %p185 = scmp.eq.s32.totalorder %s25, 3
      %p186 = por %p184, %p185
      %p187 = scmp.ne.s32.totalorder %s178, %s179
      %p188 = scmp.eq.s32.totalorder %s25, 0
      %p189 = por %p187, %p188
      %p190 = scmp.ne.s32.totalorder %s178, %s179
      %p191 = scmp.eq.s32.totalorder %s26, 3
      %p192 = por %p190, %p191
      %p194 = scmp.ne.s32.totalorder %s179, %s193
      %p195 = scmp.eq.s32.totalorder %s26, 0
      %p196 = por %p194, %p195
      %s198 = sadd.s32 %s197, 1
      %p201 = scmp.eq.s32.totalorder %s20, 3
      %p202 = scmp.ne.s32.totalorder %s197, %s199
      %p203 = scmp.eq.s32.totalorder %s20, 0
      %p204 = por %p202, %p203
      %p205 = scmp.ne.s32.totalorder %s197, %s199
      %p206 = scmp.eq.s32.totalorder %s25, 3
      %p207 = por %p205, %p206
      %p208 = scmp.ne.s32.totalorder %s199, %s200
      %p209 = scmp.eq.s32.totalorder %s25, 0
      %p210 = por %p208, %p209
      %p211 = scmp.ne.s32.totalorder %s199, %s200
      %p212 = scmp.eq.s32.totalorder %s26, 3
      %p213 = por %p211, %p212
      %p215 = scmp.ne.s32.totalorder %s200, %s214
      %p216 = scmp.eq.s32.totalorder %s26, 0
      %p217 = por %p215, %p216
      %s219 = sadd.s32 %s218, 1
      %p222 = scmp.eq.s32.totalorder %s20, 3
      %p223 = scmp.ne.s32.totalorder %s218, %s220
      %p224 = scmp.eq.s32.totalorder %s20, 0
      %p225 = por %p223, %p224
      %p226 = scmp.ne.s32.totalorder %s218, %s220
      %p227 = scmp.eq.s32.totalorder %s25, 3
      %p228 = por %p226, %p227
      %p229 = scmp.ne.s32.totalorder %s220, %s221
      %p230 = scmp.eq.s32.totalorder %s25, 0
      %p231 = por %p229, %p230
      %p232 = scmp.ne.s32.totalorder %s220, %s221
      %p233 = scmp.eq.s32.totalorder %s26, 3
      %p234 = por %p232, %p233
      %p236 = scmp.ne.s32.totalorder %s221, %s235
      %p237 = scmp.eq.s32.totalorder %s26, 0
      %p238 = por %p236, %p237
      %s240 = sadd.s32 %s239, 1
      %p243 = scmp.eq.s32.totalorder %s20, 3
      %p244 = scmp.ne.s32.totalorder %s239, %s241
      %p245 = scmp.eq.s32.totalorder %s20, 0
      %p246 = por %p244, %p245
      %p247 = scmp.ne.s32.totalorder %s239, %s241
      %p248 = scmp.eq.s32.totalorder %s25, 3
      %p249 = por %p247, %p248
      %p250 = scmp.ne.s32.totalorder %s241, %s242
      %p251 = scmp.eq.s32.totalorder %s25, 0
      %p252 = por %p250, %p251
      %p253 = scmp.ne.s32.totalorder %s241, %s242
      %p254 = scmp.eq.s32.totalorder %s26, 3
      %p255 = por %p253, %p254
      %p257 = scmp.ne.s32.totalorder %s242, %s256
      %p258 = scmp.eq.s32.totalorder %s26, 0
      %p259 = por %p257, %p258
      %s261 = sadd.s32 %s260, 1
      %p264 = scmp.eq.s32.totalorder %s20, 3
      %p265 = scmp.ne.s32.totalorder %s260, %s262
      %p266 = scmp.eq.s32.totalorder %s20, 0
      %p267 = por %p265, %p266
      %p268 = scmp.ne.s32.totalorder %s260, %s262
      %p269 = scmp.eq.s32.totalorder %s25, 3
      %p270 = por %p268, %p269
      %p271 = scmp.ne.s32.totalorder %s262, %s263
      %p272 = scmp.eq.s32.totalorder %s25, 0
      %p273 = por %p271, %p272
      %p274 = scmp.ne.s32.totalorder %s262, %s263
      %p275 = scmp.eq.s32.totalorder %s26, 3
      %p276 = por %p274, %p275
      %p278 = scmp.ne.s32.totalorder %s263, %s277
      %p279 = scmp.eq.s32.totalorder %s26, 0
      %p280 = por %p278, %p279
      %s281 = ssub.s32 %s27, %s39
      %p282 = scmp.eq.s32.totalorder %s281, 0
      %s284 = sadd.s32 %s283, 1
      %s285 = scalar_select %p282, %s283, %s284
      %p288 = pneg %p282
      %p289 = scmp.eq.s32.totalorder %s20, 3
      %p290 = por %p288, %p289
      %p291 = scmp.ne.s32.totalorder %s283, %s286
      %p292 = scmp.eq.s32.totalorder %s20, 0
      %p293 = por %p291, %p292
      %p294 = scmp.ne.s32.totalorder %s283, %s286
      %p295 = scmp.eq.s32.totalorder %s25, 3
      %p296 = por %p294, %p295
      %p297 = scmp.ne.s32.totalorder %s286, %s287
      %p298 = scmp.eq.s32.totalorder %s25, 0
      %p299 = por %p297, %p298
      %p300 = scmp.ne.s32.totalorder %s286, %s287
      %p301 = scmp.eq.s32.totalorder %s26, 3
      %p302 = por %p300, %p301
      %p304 = scmp.ne.s32.totalorder %s287, %s303
      %p305 = scmp.eq.s32.totalorder %s26, 0
      %p306 = por %p304, %p305
      %p307 = scmp.le.s32.totalorder 1, %s20
      %p308 = scmp.lt.s32.totalorder %s20, 5
      %p309 = pnand %p307, %p308
      %p310 = pneg %p309
      // Predicated region
      $region9: #{tpu_custom_call.1} parent=5 // pred_check
        _
      $region10: #{tpu_custom_call.1} parent=5 // pred_check_branch
        %312 = sbr.rel (%p309) target = $region12
      $region11: #{tpu_custom_call.1} parent=5 // pred_region
        %s313 = ssub.s32 %s20, 1
        // Predicated region
        $region13: #{tpu_custom_call.1} parent=11 // pred_check
          %p314 = pneg %p105
        $region14: #{tpu_custom_call.1} parent=11 // pred_check_branch
          %316 = sbr.rel (%p314) target = $region16
        $region15: #{tpu_custom_call.1} parent=11 // pred_region
          _
        $region16: #{tpu_custom_call.1} parent=11 // pred_fallthru
          _
        // Predicated region
        $region17: #{tpu_custom_call.1} parent=11 // pred_check
          %p317 = pneg %p126
        $region18: #{tpu_custom_call.1} parent=11 // pred_check_branch
          %319 = sbr.rel (%p317) target = $region20
        $region19: #{tpu_custom_call.1} parent=11 // pred_region
          _
        $region20: #{tpu_custom_call.1} parent=11 // pred_fallthru
          _
        // Predicated region
        $region21: #{tpu_custom_call.1} parent=11 // pred_check
          %p320 = pneg %p147
        $region22: #{tpu_custom_call.1} parent=11 // pred_check_branch
          %322 = sbr.rel (%p320) target = $region24
        $region23: #{tpu_custom_call.1} parent=11 // pred_region
          _
        $region24: #{tpu_custom_call.1} parent=11 // pred_fallthru
          _
        // Predicated region
        $region25: #{tpu_custom_call.1} parent=11 // pred_check
          %p323 = pneg %p168
        $region26: #{tpu_custom_call.1} parent=11 // pred_check_branch
          %325 = sbr.rel (%p323) target = $region28
        $region27: #{tpu_custom_call.1} parent=11 // pred_region
          _
        $region28: #{tpu_custom_call.1} parent=11 // pred_fallthru
          _
        // Predicated region
        $region29: #{tpu_custom_call.1} parent=11 // pred_check
          %p326 = pneg %p189
        $region30: #{tpu_custom_call.1} parent=11 // pred_check_branch
          %328 = sbr.rel (%p326) target = $region32
        $region31: #{tpu_custom_call.1} parent=11 // pred_region
          _
        $region32: #{tpu_custom_call.1} parent=11 // pred_fallthru
          _
        // Predicated region
        $region33: #{tpu_custom_call.1} parent=11 // pred_check
          %p329 = pneg %p210
        $region34: #{tpu_custom_call.1} parent=11 // pred_check_branch
          %331 = sbr.rel (%p329) target = $region36
        $region35: #{tpu_custom_call.1} parent=11 // pred_region
          _
        $region36: #{tpu_custom_call.1} parent=11 // pred_fallthru
          _
        // Predicated region
        $region37: #{tpu_custom_call.1} parent=11 // pred_check
          %p332 = pneg %p231
        $region38: #{tpu_custom_call.1} parent=11 // pred_check_branch
          %334 = sbr.rel (%p332) target = $region40
        $region39: #{tpu_custom_call.1} parent=11 // pred_region
          _
        $region40: #{tpu_custom_call.1} parent=11 // pred_fallthru
          _
        // Predicated region
        $region41: #{tpu_custom_call.1} parent=11 // pred_check
          %p335 = pneg %p252
        $region42: #{tpu_custom_call.1} parent=11 // pred_check_branch
          %337 = sbr.rel (%p335) target = $region44
        $region43: #{tpu_custom_call.1} parent=11 // pred_region
          _
        $region44: #{tpu_custom_call.1} parent=11 // pred_fallthru
          _
        // Predicated region
        $region45: #{tpu_custom_call.1} parent=11 // pred_check
          %p338 = pneg %p273
        $region46: #{tpu_custom_call.1} parent=11 // pred_check_branch
          %340 = sbr.rel (%p338) target = $region48
        $region47: #{tpu_custom_call.1} parent=11 // pred_region
          _
        $region48: #{tpu_custom_call.1} parent=11 // pred_fallthru
          _
      $region12: #{tpu_custom_call.1} parent=5 // pred_fallthru
        _
      %p341 = scmp.lt.s32.totalorder %s20, 4
      // Predicated region
      $region49: #{tpu_custom_call.1} parent=5 // pred_check
        %p342 = pneg %p341
      $region50: #{tpu_custom_call.1} parent=5 // pred_check_branch
        %344 = sbr.rel (%p342) target = $region52
      $region51: #{tpu_custom_call.1} parent=5 // pred_region
        // Predicated region
        $region53: #{tpu_custom_call.1} parent=51 // pred_check
          %p345 = pneg %p52
        $region54: #{tpu_custom_call.1} parent=51 // pred_check_branch
          %347 = sbr.rel (%p345) target = $region56
        $region55: #{tpu_custom_call.1} parent=51 // pred_region
          %p348 = scmp.lt.s32.totalorder %s27, 1
          %s349 = scalar_select %p348, %s27, 1
          %s350 = smul.addr %s349, 36
          %s351 = smul.addr %s350, 4
          %s352 = scalar_lea.vmem %s0, %s351
        $region56: #{tpu_custom_call.1} parent=51 // pred_fallthru
          _
        // Predicated region
        $region57: #{tpu_custom_call.1} parent=51 // pred_check
          %p353 = pneg %p78
        $region58: #{tpu_custom_call.1} parent=51 // pred_check_branch
          %355 = sbr.rel (%p353) target = $region60
        $region59: #{tpu_custom_call.1} parent=51 // pred_region
          %p356 = scmp.lt.s32.totalorder %s27, 1
          %s357 = scalar_select %p356, %s27, 1
          %s358 = scalar_lea.vmem %s1, %s357
        $region60: #{tpu_custom_call.1} parent=51 // pred_fallthru
          _
      $region52: #{tpu_custom_call.1} parent=5 // pred_fallthru
        _
      %p359 = scmp.le.s32.totalorder 1, %s20
      %p360 = scmp.lt.s32.totalorder %s20, 5
      %p361 = pnand %p359, %p360
      %p362 = pneg %p361
      // Predicated region
      $region61: #{tpu_custom_call.1} parent=5 // pred_check
        _
      $region62: #{tpu_custom_call.1} parent=5 // pred_check_branch
        %364 = sbr.rel (%p361) target = $region64
      $region63: #{tpu_custom_call.1} parent=5 // pred_region
        %s365 = ssub.s32 %s20, 1
        %p366 = scmp.lt.s32.totalorder %s29, 1
        %s367 = scalar_select %p366, %s29, 1
        %s368 = smul.addr %s367, 36
        %s369 = smul.addr %s368, 4
        %s370 = scalar_lea.vmem %s0, %s369
        %p371 = pneg %p58
        %p372 = pneg %p55
        %p373 = scmp.lt.s32.totalorder %s29, 1
        %s374 = scalar_select %p373, %s29, 1
        %s375 = scalar_lea.vmem %s1, %s374
        %p376 = pneg %p84
        %p377 = pneg %p81
        %p378 = pneg %p105
        %p379 = pneg %p102
        %p380 = pneg %p126
        %p381 = pneg %p123
        %p382 = pneg %p147
        %p383 = pneg %p144
        %p384 = pneg %p168
        %p385 = pneg %p165
        %p386 = pneg %p189
        %p387 = pneg %p186
        %p388 = pneg %p210
        %p389 = pneg %p207
        %p390 = pneg %p231
        %p391 = pneg %p228
        %p392 = pneg %p252
        %p393 = pneg %p249
        %p394 = pneg %p273
        %p395 = pneg %p270
        %p396 = pneg %p299
        %p397 = pneg %p296
        %s398 = sand.u32 %s286, 1
        %s399 = scalar_lea.sflag [#allocation4], %s398
        %s400 = sand.u32 %s286, 1
        %s401 = scalar_lea.vmem [#allocation3], %s400
        %p402 = scmp.lt.s32.totalorder %s29, 1
        %s403 = scalar_select %p402, %s29, 1
        %s404 = smul.addr %s403, 36
        %s405 = smul.addr %s404, 4
        %s406 = scalar_lea.vmem %s0, %s405
        %p407 = scmp.lt.s32.totalorder %s29, 1
        %s408 = scalar_select %p407, %s29, 1
        %s409 = scalar_lea.vmem %s1, %s408
        %p411 = scmp.eq.s32.totalorder %s30, 0
        // Predicated region
        $region65: #{tpu_custom_call.1} parent=63 // pred_check
          %p412 = pneg %p411
        $region66: #{tpu_custom_call.1} parent=63 // pred_check_branch
          %414 = sbr.rel (%p412) target = $region68
        $region67: #{tpu_custom_call.1} parent=63 // pred_region
          %415 = vst [vmem:[#allocation2] sm:$0x1] 0.0
        $region68: #{tpu_custom_call.1} parent=63 // pred_fallthru
          _
        %s416 = smul.u32 %s30, 128
        %s417 = sshra.s32 %s416, 3
        %s418 = sand.u32 %s416, 7
        %s419 = smul.addr %s417, 4
        %s420 = scalar_lea.vmem %s406, %s419
        %v421 = vld [vmem:[%s420] sm:$0xf]
        %v422 = vld [vmem:[%s420 + $0x4] sm:$0xf]
        %v423 = vld [vmem:[%s420 + $0x8] sm:$0xf]
        %v424 = vld [vmem:[%s420 + $0xc] sm:$0xf]
        %v425 = vld [vmem:[%s420 + $0x10] sm:$0xf]
        %v426 = vld [vmem:[%s420 + $0x14] sm:$0xf]
        %v427 = vld [vmem:[%s420 + $0x18] sm:$0xf]
        %v428 = vld [vmem:[%s420 + $0x1c] sm:$0xf]
        %v429 = vld [vmem:[%s420 + $0x20] sm:$0xf]
        %v430 = vld [vmem:[%s420 + $0x24] sm:$0xf]
        %v431 = vld [vmem:[%s420 + $0x28] sm:$0xf]
        %v432 = vld [vmem:[%s420 + $0x2c] sm:$0xf]
        %v433 = vld [vmem:[%s420 + $0x30] sm:$0xf]
        %v434 = vld [vmem:[%s420 + $0x34] sm:$0xf]
        %v435 = vld [vmem:[%s420 + $0x38] sm:$0xf]
        %v436 = vld [vmem:[%s420 + $0x3c] sm:$0xf]
        %v437 = vld [vmem:[%s2] sm:$0xf]
        %v438 = vld [vmem:[%s2 + $0x4] sm:$0xf]
        %v439 = vld [vmem:[%s2 + $0x8] sm:$0xf]
        %v440 = vld [vmem:[%s2 + $0xc] sm:$0x3]
        %s441 = sadd.s32 %s416, 16
        %s442 = sshra.s32 %s441, 3
        %s443 = sand.u32 %s441, 7
        %s444 = smul.addr %s442, 4
        %s445 = scalar_lea.vmem %s406, %s444
        %v446 = vld [vmem:[%s445] sm:$0xf]
        %v447 = vld [vmem:[%s445 + $0x4] sm:$0xf]
        %v448 = vld [vmem:[%s445 + $0x8] sm:$0xf]
        %v449 = vld [vmem:[%s445 + $0xc] sm:$0xf]
        %v450 = vld [vmem:[%s445 + $0x10] sm:$0xf]
        %v451 = vld [vmem:[%s445 + $0x14] sm:$0xf]
        %v452 = vld [vmem:[%s445 + $0x18] sm:$0xf]
        %v453 = vld [vmem:[%s445 + $0x1c] sm:$0xf]
        %v454 = vld [vmem:[%s445 + $0x20] sm:$0xf]
        %v455 = vld [vmem:[%s445 + $0x24] sm:$0xf]
        %v456 = vld [vmem:[%s445 + $0x28] sm:$0xf]
        %v457 = vld [vmem:[%s445 + $0x2c] sm:$0xf]
        %v458 = vld [vmem:[%s445 + $0x30] sm:$0xf]
        %v459 = vld [vmem:[%s445 + $0x34] sm:$0xf]
        %v460 = vld [vmem:[%s445 + $0x38] sm:$0xf]
        %v461 = vld [vmem:[%s445 + $0x3c] sm:$0xf]
        %s462 = scalar_lea.vmem %s2, 16
        %v463 = vld [vmem:[%s462] sm:$0xf]
        %v464 = vld [vmem:[%s462 + $0x4] sm:$0xf]
        %v465 = vld [vmem:[%s462 + $0x8] sm:$0xf]
        %v466 = vld [vmem:[%s462 + $0xc] sm:$0x3]
        %v483 = vunpack.c.l.b16 %v446
        %v484 = vunpack.c.l.b16 %v447
        %v485 = vunpack.c.l.b16 %v448
        %v486 = vunpack.c.l.b16 %v449
        %v487 = vunpack.c.l.b16 %v450
        %v488 = vunpack.c.l.b16 %v451
        %v489 = vunpack.c.l.b16 %v452
        %v490 = vunpack.c.l.b16 %v453
        %v491 = vunpack.c.l.b16 %v454
        %v492 = vunpack.c.l.b16 %v455
        %v493 = vunpack.c.l.b16 %v456
        %v494 = vunpack.c.l.b16 %v457
        %v495 = vunpack.c.l.b16 %v458
        %v496 = vunpack.c.l.b16 %v459
        %v497 = vunpack.c.l.b16 %v460
        %v498 = vunpack.c.l.b16 %v461
        %v499 = vpack.c.b16 %v484, %v483
        %v500 = vpack.c.b16 %v486, %v485
        %v501 = vpack.c.b16 %v488, %v487
        %v502 = vpack.c.b16 %v490, %v489
        %v503 = vpack.c.b16 %v492, %v491
        %v504 = vpack.c.b16 %v494, %v493
        %v505 = vpack.c.b16 %v496, %v495
        %v506 = vpack.c.b16 %v498, %v497
        %v511 = vunpack.c.l.b16 %v463
        %v512 = vunpack.c.l.b16 %v464
        %v513 = vunpack.c.l.b16 %v465
        %v514 = vunpack.c.l.b16 %v466
        %v515 = vpack.c.b16 %v512, %v511
        %v516 = vpack.c.b16 %v514, %v513
        %vm518 = vcmask 220160
        %v520 = vsel %vm518, %v499, 0
        %v523 = vsel %vm518, %v500, 0
        %v526 = vsel %vm518, %v501, 0
        %v529 = vsel %vm518, %v502, 0
        %v532 = vsel %vm518, %v503, 0
        %v535 = vsel %vm518, %v504, 0
        %v538 = vsel %vm518, %v505, 0
        %v541 = vsel %vm518, %v506, 0
        %vm543 = vcmask 1044480
        %vm544 = vcmask 1045504
        %v545 = vsel %vm543, 4294967295, 65535
        %v546 = vsel %vm544, %v545, 0
        %v548 = vand.u32 %v516, %v546
        %550 = vmatprep.subr.bf16.mxu0 0
        %551 = vmatpush1.bf16.msra.mxu0 0
        %552 = vmatprep.subr.bf16.mxu0 0
        %553 = vmatpush1.bf16.msra.mxu0 0
        %554 = vmatprep.subr.bf16.mxu0 0
        %555 = vmatpush1.bf16.msra.mxu0 0
        %556 = vmatprep.subr.bf16.mxu0 0
        %557 = vmatpush1.bf16.msra.mxu0 0
        %558 = vmatprep.subr.bf16.mxu0 0
        %559 = vmatpush1.bf16.msra.mxu0 0
        %560 = vmatprep.subr.bf16.mxu0 0
        %561 = vmatpush1.bf16.msra.mxu0 0
        %562 = vmatprep.subr.bf16.mxu0 0
        %563 = vmatpush1.bf16.msra.mxu0 %v548
        %564 = vmatprep.subr.bf16.mxu0 0
        %565 = vmatpush1.bf16.msra.mxu0 %v515
        %566 = vmatprep.subr.bf16.mxu0 0
        %567 = vmatpush2.bf16.msra.mxu0 0
        %568 = vmatprep.subr.bf16.mxu0 0
        %569 = vmatpush2.bf16.msra.mxu0 0
        %570 = vmatprep.subr.bf16.mxu0 0
        %571 = vmatpush2.bf16.msra.mxu0 0
        %572 = vmatprep.subr.bf16.mxu0 0
        %573 = vmatpush2.bf16.msra.mxu0 0
        %574 = vmatprep.subr.bf16.mxu0 0
        %575 = vmatpush2.bf16.msra.mxu0 0
        %576 = vmatprep.subr.bf16.mxu0 0
        %577 = vmatpush2.bf16.msra.mxu0 0
        %578 = vmatprep.subr.bf16.mxu0 0
        %579 = vmatpush2.bf16.msra.mxu0 0
        %580 = vmatprep.subr.bf16.mxu0 0
        %581 = vmatpush2.bf16.msra.mxu0 0
        %582 = vmatprep.mubr.bf16.mxu0 0
        %583 = vmatmul.mubr.bf16.gmra.mxu0 %v520
        %v584 = vpop.f32.mrf.mxu0
        %v585 = vadd.f32 0.0, %v584
        %v586 = vpop.f32.mrf.mxu0
        %v587 = vpop.f32.mrf.mxu0
        %v588 = vadd.f32 0.0, %v587
        %v589 = vpop.f32.mrf.mxu0
        %590 = vmatprep.mubr.bf16.mxu0 0
        %591 = vmatmul.mubr.bf16.gmra.mxu0 %v523
        %v592 = vpop.f32.mrf.mxu0
        %v593 = vadd.f32 0.0, %v592
        %v594 = vpop.f32.mrf.mxu0
        %v595 = vpop.f32.mrf.mxu0
        %v596 = vadd.f32 0.0, %v595
        %v597 = vpop.f32.mrf.mxu0
        %598 = vmatprep.mubr.bf16.mxu0 0
        %599 = vmatmul.mubr.bf16.gmra.mxu0 %v526
        %v600 = vpop.f32.mrf.mxu0
        %v601 = vadd.f32 0.0, %v600
        %v602 = vpop.f32.mrf.mxu0
        %v603 = vpop.f32.mrf.mxu0
        %v604 = vadd.f32 0.0, %v603
        %v605 = vpop.f32.mrf.mxu0
        %606 = vmatprep.mubr.bf16.mxu0 0
        %607 = vmatmul.mubr.bf16.gmra.mxu0 %v529
        %v608 = vpop.f32.mrf.mxu0
        %v609 = vadd.f32 0.0, %v608
        %v610 = vpop.f32.mrf.mxu0
        %v611 = vpop.f32.mrf.mxu0
        %v612 = vadd.f32 0.0, %v611
        %v613 = vpop.f32.mrf.mxu0
        %614 = vmatprep.mubr.bf16.mxu0 0
        %615 = vmatmul.mubr.bf16.gmra.mxu0 %v532
        %v616 = vpop.f32.mrf.mxu0
        %v617 = vadd.f32 0.0, %v616
        %v618 = vpop.f32.mrf.mxu0
        %v619 = vpop.f32.mrf.mxu0
        %v620 = vadd.f32 0.0, %v619
        %v621 = vpop.f32.mrf.mxu0
        %622 = vmatprep.mubr.bf16.mxu0 0
        %623 = vmatmul.mubr.bf16.gmra.mxu0 %v535
        %v624 = vpop.f32.mrf.mxu0
        %v625 = vadd.f32 0.0, %v624
        %v626 = vpop.f32.mrf.mxu0
        %v627 = vpop.f32.mrf.mxu0
        %v628 = vadd.f32 0.0, %v627
        %v629 = vpop.f32.mrf.mxu0
        %630 = vmatprep.mubr.bf16.mxu0 0
        %631 = vmatmul.mubr.bf16.gmra.mxu0 %v538
        %v632 = vpop.f32.mrf.mxu0
        %v633 = vadd.f32 0.0, %v632
        %v634 = vpop.f32.mrf.mxu0
        %v635 = vpop.f32.mrf.mxu0
        %v636 = vadd.f32 0.0, %v635
        %v637 = vpop.f32.mrf.mxu0
        %638 = vmatprep.mubr.bf16.mxu0 0
        %639 = vmatmul.mubr.bf16.gmra.mxu0 %v541
        %v640 = vpop.f32.mrf.mxu0
        %v641 = vadd.f32 0.0, %v640
        %v642 = vpop.f32.mrf.mxu0
        %v643 = vpop.f32.mrf.mxu0
        %v644 = vadd.f32 0.0, %v643
        %v645 = vpop.f32.mrf.mxu0
        %646 = vdwg.mxu0
        %v663 = vunpack.c.l.b16 %v421
        %v664 = vunpack.c.l.b16 %v422
        %v665 = vunpack.c.l.b16 %v423
        %v666 = vunpack.c.l.b16 %v424
        %v667 = vunpack.c.l.b16 %v425
        %v668 = vunpack.c.l.b16 %v426
        %v669 = vunpack.c.l.b16 %v427
        %v670 = vunpack.c.l.b16 %v428
        %v671 = vunpack.c.l.b16 %v429
        %v672 = vunpack.c.l.b16 %v430
        %v673 = vunpack.c.l.b16 %v431
        %v674 = vunpack.c.l.b16 %v432
        %v675 = vunpack.c.l.b16 %v433
        %v676 = vunpack.c.l.b16 %v434
        %v677 = vunpack.c.l.b16 %v435
        %v678 = vunpack.c.l.b16 %v436
        %v679 = vpack.c.b16 %v664, %v663
        %v680 = vpack.c.b16 %v666, %v665
        %v681 = vpack.c.b16 %v668, %v667
        %v682 = vpack.c.b16 %v670, %v669
        %v683 = vpack.c.b16 %v672, %v671
        %v684 = vpack.c.b16 %v674, %v673
        %v685 = vpack.c.b16 %v676, %v675
        %v686 = vpack.c.b16 %v678, %v677
        %v691 = vunpack.c.l.b16 %v437
        %v692 = vunpack.c.l.b16 %v438
        %v693 = vunpack.c.l.b16 %v439
        %v694 = vunpack.c.l.b16 %v440
        %v695 = vpack.c.b16 %v692, %v691
        %v696 = vpack.c.b16 %v694, %v693
        %v699 = vsel %vm518, %v679, 0
        %v702 = vsel %vm518, %v680, 0
        %v705 = vsel %vm518, %v681, 0
        %v708 = vsel %vm518, %v682, 0
        %v711 = vsel %vm518, %v683, 0
        %v714 = vsel %vm518, %v684, 0
        %v717 = vsel %vm518, %v685, 0
        %v720 = vsel %vm518, %v686, 0
        %v723 = vand.u32 %v696, %v546
        %725 = vmatprep.subr.bf16.mxu0 0
        %726 = vmatpush1.bf16.msra.mxu0 0
        %727 = vmatprep.subr.bf16.mxu0 0
        %728 = vmatpush1.bf16.msra.mxu0 0
        %729 = vmatprep.subr.bf16.mxu0 0
        %730 = vmatpush1.bf16.msra.mxu0 0
        %731 = vmatprep.subr.bf16.mxu0 0
        %732 = vmatpush1.bf16.msra.mxu0 0
        %733 = vmatprep.subr.bf16.mxu0 0
        %734 = vmatpush1.bf16.msra.mxu0 0
        %735 = vmatprep.subr.bf16.mxu0 0
        %736 = vmatpush1.bf16.msra.mxu0 0
        %737 = vmatprep.subr.bf16.mxu0 0
        %738 = vmatpush1.bf16.msra.mxu0 %v723
        %739 = vmatprep.subr.bf16.mxu0 0
        %740 = vmatpush1.bf16.msra.mxu0 %v695
        %741 = vmatprep.subr.bf16.mxu0 0
        %742 = vmatpush2.bf16.msra.mxu0 0
        %743 = vmatprep.subr.bf16.mxu0 0
        %744 = vmatpush2.bf16.msra.mxu0 0
        %745 = vmatprep.subr.bf16.mxu0 0
        %746 = vmatpush2.bf16.msra.mxu0 0
        %747 = vmatprep.subr.bf16.mxu0 0
        %748 = vmatpush2.bf16.msra.mxu0 0
        %749 = vmatprep.subr.bf16.mxu0 0
        %750 = vmatpush2.bf16.msra.mxu0 0
        %751 = vmatprep.subr.bf16.mxu0 0
        %752 = vmatpush2.bf16.msra.mxu0 0
        %753 = vmatprep.subr.bf16.mxu0 0
        %754 = vmatpush2.bf16.msra.mxu0 0
        %755 = vmatprep.subr.bf16.mxu0 0
        %756 = vmatpush2.bf16.msra.mxu0 0
        %757 = vmatprep.mubr.bf16.mxu0 0
        %758 = vmatmul.mubr.bf16.gmra.mxu0 %v699
        %v759 = vpop.f32.mrf.mxu0
        %v760 = vadd.f32 %v585, %v759
        %v761 = vpop.f32.mrf.mxu0
        %v762 = vpop.f32.mrf.mxu0
        %v763 = vadd.f32 %v588, %v762
        %v764 = vpop.f32.mrf.mxu0
        %765 = vmatprep.mubr.bf16.mxu0 0
        %766 = vmatmul.mubr.bf16.gmra.mxu0 %v702
        %v767 = vpop.f32.mrf.mxu0
        %v768 = vadd.f32 %v593, %v767
        %v769 = vpop.f32.mrf.mxu0
        %v770 = vpop.f32.mrf.mxu0
        %v771 = vadd.f32 %v596, %v770
        %v772 = vpop.f32.mrf.mxu0
        %773 = vmatprep.mubr.bf16.mxu0 0
        %774 = vmatmul.mubr.bf16.gmra.mxu0 %v705
        %v775 = vpop.f32.mrf.mxu0
        %v776 = vadd.f32 %v601, %v775
        %v777 = vpop.f32.mrf.mxu0
        %v778 = vpop.f32.mrf.mxu0
        %v779 = vadd.f32 %v604, %v778
        %v780 = vpop.f32.mrf.mxu0
        %781 = vmatprep.mubr.bf16.mxu0 0
        %782 = vmatmul.mubr.bf16.gmra.mxu0 %v708
        %v783 = vpop.f32.mrf.mxu0
        %v784 = vadd.f32 %v609, %v783
        %v785 = vpop.f32.mrf.mxu0
        %v786 = vpop.f32.mrf.mxu0
        %v787 = vadd.f32 %v612, %v786
        %v788 = vpop.f32.mrf.mxu0
        %789 = vmatprep.mubr.bf16.mxu0 0
        %790 = vmatmul.mubr.bf16.gmra.mxu0 %v711
        %v791 = vpop.f32.mrf.mxu0
        %v792 = vadd.f32 %v617, %v791
        %v793 = vpop.f32.mrf.mxu0
        %v794 = vpop.f32.mrf.mxu0
        %v795 = vadd.f32 %v620, %v794
        %v796 = vpop.f32.mrf.mxu0
        %797 = vmatprep.mubr.bf16.mxu0 0
        %798 = vmatmul.mubr.bf16.gmra.mxu0 %v714
        %v799 = vpop.f32.mrf.mxu0
        %v800 = vadd.f32 %v625, %v799
        %v801 = vpop.f32.mrf.mxu0
        %v802 = vpop.f32.mrf.mxu0
        %v803 = vadd.f32 %v628, %v802
        %v804 = vpop.f32.mrf.mxu0
        %805 = vmatprep.mubr.bf16.mxu0 0
        %806 = vmatmul.mubr.bf16.gmra.mxu0 %v717
        %v807 = vpop.f32.mrf.mxu0
        %v808 = vadd.f32 %v633, %v807
        %v809 = vpop.f32.mrf.mxu0
        %v810 = vpop.f32.mrf.mxu0
        %v811 = vadd.f32 %v636, %v810
        %v812 = vpop.f32.mrf.mxu0
        %813 = vmatprep.mubr.bf16.mxu0 0
        %814 = vmatmul.mubr.bf16.gmra.mxu0 %v720
        %v815 = vpop.f32.mrf.mxu0
        %v816 = vadd.f32 %v641, %v815
        %v817 = vpop.f32.mrf.mxu0
        %v818 = vpop.f32.mrf.mxu0
        %v819 = vadd.f32 %v644, %v818
        %v820 = vpop.f32.mrf.mxu0
        %821 = vdwg.mxu0
        %s822 = sadd.s32 %s416, 32
        %s823 = sshra.s32 %s822, 3
        %s824 = sand.u32 %s822, 7
        %s825 = smul.addr %s823, 4
        %s826 = scalar_lea.vmem %s406, %s825
        %v827 = vld [vmem:[%s826] sm:$0xf]
        %v828 = vld [vmem:[%s826 + $0x4] sm:$0xf]
        %v829 = vld [vmem:[%s826 + $0x8] sm:$0xf]
        %v830 = vld [vmem:[%s826 + $0xc] sm:$0xf]
        %v831 = vld [vmem:[%s826 + $0x10] sm:$0xf]
        %v832 = vld [vmem:[%s826 + $0x14] sm:$0xf]
        %v833 = vld [vmem:[%s826 + $0x18] sm:$0xf]
        %v834 = vld [vmem:[%s826 + $0x1c] sm:$0xf]
        %v835 = vld [vmem:[%s826 + $0x20] sm:$0xf]
        %v836 = vld [vmem:[%s826 + $0x24] sm:$0xf]
        %v837 = vld [vmem:[%s826 + $0x28] sm:$0xf]
        %v838 = vld [vmem:[%s826 + $0x2c] sm:$0xf]
        %v839 = vld [vmem:[%s826 + $0x30] sm:$0xf]
        %v840 = vld [vmem:[%s826 + $0x34] sm:$0xf]
        %v841 = vld [vmem:[%s826 + $0x38] sm:$0xf]
        %v842 = vld [vmem:[%s826 + $0x3c] sm:$0xf]
        %s843 = scalar_lea.vmem %s2, 32
        %v844 = vld [vmem:[%s843] sm:$0xf]
        %v845 = vld [vmem:[%s843 + $0x4] sm:$0xf]
        %v846 = vld [vmem:[%s843 + $0x8] sm:$0xf]
        %v847 = vld [vmem:[%s843 + $0xc] sm:$0x3]
        %v864 = vunpack.c.l.b16 %v827
        %v865 = vunpack.c.l.b16 %v828
        %v866 = vunpack.c.l.b16 %v829
        %v867 = vunpack.c.l.b16 %v830
        %v868 = vunpack.c.l.b16 %v831
        %v869 = vunpack.c.l.b16 %v832
        %v870 = vunpack.c.l.b16 %v833
        %v871 = vunpack.c.l.b16 %v834
        %v872 = vunpack.c.l.b16 %v835
        %v873 = vunpack.c.l.b16 %v836
        %v874 = vunpack.c.l.b16 %v837
        %v875 = vunpack.c.l.b16 %v838
        %v876 = vunpack.c.l.b16 %v839
        %v877 = vunpack.c.l.b16 %v840
        %v878 = vunpack.c.l.b16 %v841
        %v879 = vunpack.c.l.b16 %v842
        %v880 = vpack.c.b16 %v865, %v864
        %v881 = vpack.c.b16 %v867, %v866
        %v882 = vpack.c.b16 %v869, %v868
        %v883 = vpack.c.b16 %v871, %v870
        %v884 = vpack.c.b16 %v873, %v872
        %v885 = vpack.c.b16 %v875, %v874
        %v886 = vpack.c.b16 %v877, %v876
        %v887 = vpack.c.b16 %v879, %v878
        %v892 = vunpack.c.l.b16 %v844
        %v893 = vunpack.c.l.b16 %v845
        %v894 = vunpack.c.l.b16 %v846
        %v895 = vunpack.c.l.b16 %v847
        %v896 = vpack.c.b16 %v893, %v892
        %v897 = vpack.c.b16 %v895, %v894
        %v900 = vsel %vm518, %v880, 0
        %v903 = vsel %vm518, %v881, 0
        %v906 = vsel %vm518, %v882, 0
        %v909 = vsel %vm518, %v883, 0
        %v912 = vsel %vm518, %v884, 0
        %v915 = vsel %vm518, %v885, 0
        %v918 = vsel %vm518, %v886, 0
        %v921 = vsel %vm518, %v887, 0
        %v924 = vand.u32 %v897, %v546
        %926 = vmatprep.subr.bf16.mxu0 0
        %927 = vmatpush1.bf16.msra.mxu0 0
        %928 = vmatprep.subr.bf16.mxu0 0
        %929 = vmatpush1.bf16.msra.mxu0 0
        %930 = vmatprep.subr.bf16.mxu0 0
        %931 = vmatpush1.bf16.msra.mxu0 0
        %932 = vmatprep.subr.bf16.mxu0 0
        %933 = vmatpush1.bf16.msra.mxu0 0
        %934 = vmatprep.subr.bf16.mxu0 0
        %935 = vmatpush1.bf16.msra.mxu0 0
        %936 = vmatprep.subr.bf16.mxu0 0
        %937 = vmatpush1.bf16.msra.mxu0 0
        %938 = vmatprep.subr.bf16.mxu0 0
        %939 = vmatpush1.bf16.msra.mxu0 %v924
        %940 = vmatprep.subr.bf16.mxu0 0
        %941 = vmatpush1.bf16.msra.mxu0 %v896
        %942 = vmatprep.subr.bf16.mxu0 0
        %943 = vmatpush2.bf16.msra.mxu0 0
        %944 = vmatprep.subr.bf16.mxu0 0
        %945 = vmatpush2.bf16.msra.mxu0 0
        %946 = vmatprep.subr.bf16.mxu0 0
        %947 = vmatpush2.bf16.msra.mxu0 0
        %948 = vmatprep.subr.bf16.mxu0 0
        %949 = vmatpush2.bf16.msra.mxu0 0
        %950 = vmatprep.subr.bf16.mxu0 0
        %951 = vmatpush2.bf16.msra.mxu0 0
        %952 = vmatprep.subr.bf16.mxu0 0
        %953 = vmatpush2.bf16.msra.mxu0 0
        %954 = vmatprep.subr.bf16.mxu0 0
        %955 = vmatpush2.bf16.msra.mxu0 0
        %956 = vmatprep.subr.bf16.mxu0 0
        %957 = vmatpush2.bf16.msra.mxu0 0
        %958 = vmatprep.mubr.bf16.mxu0 0
        %959 = vmatmul.mubr.bf16.gmra.mxu0 %v900
        %v960 = vpop.f32.mrf.mxu0
        %v961 = vadd.f32 0.0, %v960
        %v962 = vpop.f32.mrf.mxu0
        %v963 = vpop.f32.mrf.mxu0
        %v964 = vadd.f32 0.0, %v963
        %v965 = vpop.f32.mrf.mxu0
        %966 = vmatprep.mubr.bf16.mxu0 0
        %967 = vmatmul.mubr.bf16.gmra.mxu0 %v903
        %v968 = vpop.f32.mrf.mxu0
        %v969 = vadd.f32 0.0, %v968
        %v970 = vpop.f32.mrf.mxu0
        %v971 = vpop.f32.mrf.mxu0
        %v972 = vadd.f32 0.0, %v971
        %v973 = vpop.f32.mrf.mxu0
        %974 = vmatprep.mubr.bf16.mxu0 0
        %975 = vmatmul.mubr.bf16.gmra.mxu0 %v906
        %v976 = vpop.f32.mrf.mxu0
        %v977 = vadd.f32 0.0, %v976
        %v978 = vpop.f32.mrf.mxu0
        %v979 = vpop.f32.mrf.mxu0
        %v980 = vadd.f32 0.0, %v979
        %v981 = vpop.f32.mrf.mxu0
        %982 = vmatprep.mubr.bf16.mxu0 0
        %983 = vmatmul.mubr.bf16.gmra.mxu0 %v909
        %v984 = vpop.f32.mrf.mxu0
        %v985 = vadd.f32 0.0, %v984
        %v986 = vpop.f32.mrf.mxu0
        %v987 = vpop.f32.mrf.mxu0
        %v988 = vadd.f32 0.0, %v987
        %v989 = vpop.f32.mrf.mxu0
        %990 = vmatprep.mubr.bf16.mxu0 0
        %991 = vmatmul.mubr.bf16.gmra.mxu0 %v912
        %v992 = vpop.f32.mrf.mxu0
        %v993 = vadd.f32 0.0, %v992
        %v994 = vpop.f32.mrf.mxu0
        %v995 = vpop.f32.mrf.mxu0
        %v996 = vadd.f32 0.0, %v995
        %v997 = vpop.f32.mrf.mxu0
        %998 = vmatprep.mubr.bf16.mxu0 0
        %999 = vmatmul.mubr.bf16.gmra.mxu0 %v915
        %v1000 = vpop.f32.mrf.mxu0
        %v1001 = vadd.f32 0.0, %v1000
        %v1002 = vpop.f32.mrf.mxu0
        %v1003 = vpop.f32.mrf.mxu0
        %v1004 = vadd.f32 0.0, %v1003
        %v1005 = vpop.f32.mrf.mxu0
        %1006 = vmatprep.mubr.bf16.mxu0 0
        %1007 = vmatmul.mubr.bf16.gmra.mxu0 %v918
        %v1008 = vpop.f32.mrf.mxu0
        %v1009 = vadd.f32 0.0, %v1008
        %v1010 = vpop.f32.mrf.mxu0
        %v1011 = vpop.f32.mrf.mxu0
        %v1012 = vadd.f32 0.0, %v1011
        %v1013 = vpop.f32.mrf.mxu0
        %1014 = vmatprep.mubr.bf16.mxu0 0
        %1015 = vmatmul.mubr.bf16.gmra.mxu0 %v921
        %v1016 = vpop.f32.mrf.mxu0
        %v1017 = vadd.f32 0.0, %v1016
        %v1018 = vpop.f32.mrf.mxu0
        %v1019 = vpop.f32.mrf.mxu0
        %v1020 = vadd.f32 0.0, %v1019
        %v1021 = vpop.f32.mrf.mxu0
        %1022 = vdwg.mxu0
        %v1023 = vadd.f32 %v760, %v961
        %v1024 = vadd.f32 %v763, %v964
        %v1025 = vadd.f32 %v768, %v969
        %v1026 = vadd.f32 %v771, %v972
        %v1027 = vadd.f32 %v776, %v977
        %v1028 = vadd.f32 %v779, %v980
        %v1029 = vadd.f32 %v784, %v985
        %v1030 = vadd.f32 %v787, %v988
        %v1031 = vadd.f32 %v792, %v993
        %v1032 = vadd.f32 %v795, %v996
        %v1033 = vadd.f32 %v800, %v1001
        %v1034 = vadd.f32 %v803, %v1004
        %v1035 = vadd.f32 %v808, %v1009
        %v1036 = vadd.f32 %v811, %v1012
        %v1037 = vadd.f32 %v816, %v1017
        %v1038 = vadd.f32 %v819, %v1020
        %v1039 = vld [vmem:[%s3] sm:$0x1]
        %v1041 = vlaneseq
        %v1042 = vshrl.u32 %v1041, 7
        %v1043 = vsub.s32 0, %v1042
        %v1044 = vrot.slane %v1039, %v1043
        %v1046 = vadd.f32 %v1023, %v1044
        %v1047 = vadd.f32 %v1024, %v1044
        %v1048 = vadd.f32 %v1025, %v1044
        %v1049 = vadd.f32 %v1026, %v1044
        %v1050 = vadd.f32 %v1027, %v1044
        %v1051 = vadd.f32 %v1028, %v1044
        %v1052 = vadd.f32 %v1029, %v1044
        %v1053 = vadd.f32 %v1030, %v1044
        %v1054 = vadd.f32 %v1031, %v1044
        %v1055 = vadd.f32 %v1032, %v1044
        %v1056 = vadd.f32 %v1033, %v1044
        %v1057 = vadd.f32 %v1034, %v1044
        %v1058 = vadd.f32 %v1035, %v1044
        %v1059 = vadd.f32 %v1036, %v1044
        %v1060 = vadd.f32 %v1037, %v1044
        %v1061 = vadd.f32 %v1038, %v1044
        %v1062 = vmul.f32 %v1046, 0.5
        %v1063 = vmul.f32 %v1047, 0.5
        %v1064 = vmul.f32 %v1048, 0.5
        %v1065 = vmul.f32 %v1049, 0.5
        %v1066 = vmul.f32 %v1050, 0.5
        %v1067 = vmul.f32 %v1051, 0.5
        %v1068 = vmul.f32 %v1052, 0.5
        %v1069 = vmul.f32 %v1053, 0.5
        %v1070 = vmul.f32 %v1054, 0.5
        %v1071 = vmul.f32 %v1055, 0.5
        %v1072 = vmul.f32 %v1056, 0.5
        %v1073 = vmul.f32 %v1057, 0.5
        %v1074 = vmul.f32 %v1058, 0.5
        %v1075 = vmul.f32 %v1059, 0.5
        %v1076 = vmul.f32 %v1060, 0.5
        %v1077 = vmul.f32 %v1061, 0.5
        %v1078 = vmul.f32 %v1046, 0.044715
        %v1079 = vmul.f32 %v1047, 0.044715
        %v1080 = vmul.f32 %v1048, 0.044715
        %v1081 = vmul.f32 %v1049, 0.044715
        %v1082 = vmul.f32 %v1050, 0.044715
        %v1083 = vmul.f32 %v1051, 0.044715
        %v1084 = vmul.f32 %v1052, 0.044715
        %v1085 = vmul.f32 %v1053, 0.044715
        %v1086 = vmul.f32 %v1054, 0.044715
        %v1087 = vmul.f32 %v1055, 0.044715
        %v1088 = vmul.f32 %v1056, 0.044715
        %v1089 = vmul.f32 %v1057, 0.044715
        %v1090 = vmul.f32 %v1058, 0.044715
        %v1091 = vmul.f32 %v1059, 0.044715
        %v1092 = vmul.f32 %v1060, 0.044715
        %v1093 = vmul.f32 %v1061, 0.044715
        %v1094 = vmul.f32 %v1078, %v1046
        %v1095 = vmul.f32 %v1079, %v1047
        %v1096 = vmul.f32 %v1080, %v1048
        %v1097 = vmul.f32 %v1081, %v1049
        %v1098 = vmul.f32 %v1082, %v1050
        %v1099 = vmul.f32 %v1083, %v1051
        %v1100 = vmul.f32 %v1084, %v1052
        %v1101 = vmul.f32 %v1085, %v1053
        %v1102 = vmul.f32 %v1086, %v1054
        %v1103 = vmul.f32 %v1087, %v1055
        %v1104 = vmul.f32 %v1088, %v1056
        %v1105 = vmul.f32 %v1089, %v1057
        %v1106 = vmul.f32 %v1090, %v1058
        %v1107 = vmul.f32 %v1091, %v1059
        %v1108 = vmul.f32 %v1092, %v1060
        %v1109 = vmul.f32 %v1093, %v1061
        %v1110 = vmul.f32 %v1094, %v1046
        %v1111 = vmul.f32 %v1095, %v1047
        %v1112 = vmul.f32 %v1096, %v1048
        %v1113 = vmul.f32 %v1097, %v1049
        %v1114 = vmul.f32 %v1098, %v1050
        %v1115 = vmul.f32 %v1099, %v1051
        %v1116 = vmul.f32 %v1100, %v1052
        %v1117 = vmul.f32 %v1101, %v1053
        %v1118 = vmul.f32 %v1102, %v1054
        %v1119 = vmul.f32 %v1103, %v1055
        %v1120 = vmul.f32 %v1104, %v1056
        %v1121 = vmul.f32 %v1105, %v1057
        %v1122 = vmul.f32 %v1106, %v1058
        %v1123 = vmul.f32 %v1107, %v1059
        %v1124 = vmul.f32 %v1108, %v1060
        %v1125 = vmul.f32 %v1109, %v1061
        %v1126 = vadd.f32 %v1046, %v1110
        %v1127 = vadd.f32 %v1047, %v1111
        %v1128 = vadd.f32 %v1048, %v1112
        %v1129 = vadd.f32 %v1049, %v1113
        %v1130 = vadd.f32 %v1050, %v1114
        %v1131 = vadd.f32 %v1051, %v1115
        %v1132 = vadd.f32 %v1052, %v1116
        %v1133 = vadd.f32 %v1053, %v1117
        %v1134 = vadd.f32 %v1054, %v1118
        %v1135 = vadd.f32 %v1055, %v1119
        %v1136 = vadd.f32 %v1056, %v1120
        %v1137 = vadd.f32 %v1057, %v1121
        %v1138 = vadd.f32 %v1058, %v1122
        %v1139 = vadd.f32 %v1059, %v1123
        %v1140 = vadd.f32 %v1060, %v1124
        %v1141 = vadd.f32 %v1061, %v1125
        %v1142 = vmul.f32 %v1126, 0.7978846
        %v1143 = vmul.f32 %v1127, 0.7978846
        %v1144 = vmul.f32 %v1128, 0.7978846
        %v1145 = vmul.f32 %v1129, 0.7978846
        %v1146 = vmul.f32 %v1130, 0.7978846
        %v1147 = vmul.f32 %v1131, 0.7978846
        %v1148 = vmul.f32 %v1132, 0.7978846
        %v1149 = vmul.f32 %v1133, 0.7978846
        %v1150 = vmul.f32 %v1134, 0.7978846
        %v1151 = vmul.f32 %v1135, 0.7978846
        %v1152 = vmul.f32 %v1136, 0.7978846
        %v1153 = vmul.f32 %v1137, 0.7978846
        %v1154 = vmul.f32 %v1138, 0.7978846
        %v1155 = vmul.f32 %v1139, 0.7978846
        %v1156 = vmul.f32 %v1140, 0.7978846
        %v1157 = vmul.f32 %v1141, 0.7978846
        %v1158 = vtanh.pop %v1142
        %v1159 = vtanh.pop %v1143
        %v1160 = vtanh.pop %v1144
        %v1161 = vtanh.pop %v1145
        %v1162 = vtanh.pop %v1146
        %v1163 = vtanh.pop %v1147
        %v1164 = vtanh.pop %v1148
        %v1165 = vtanh.pop %v1149
        %v1166 = vtanh.pop %v1150
        %v1167 = vtanh.pop %v1151
        %v1168 = vtanh.pop %v1152
        %v1169 = vtanh.pop %v1153
        %v1170 = vtanh.pop %v1154
        %v1171 = vtanh.pop %v1155
        %v1172 = vtanh.pop %v1156
        %v1173 = vtanh.pop %v1157
        %v1174 = vadd.f32 %v1158, 1.0
        %v1175 = vadd.f32 %v1159, 1.0
        %v1176 = vadd.f32 %v1160, 1.0
        %v1177 = vadd.f32 %v1161, 1.0
        %v1178 = vadd.f32 %v1162, 1.0
        %v1179 = vadd.f32 %v1163, 1.0
        %v1180 = vadd.f32 %v1164, 1.0
        %v1181 = vadd.f32 %v1165, 1.0
        %v1182 = vadd.f32 %v1166, 1.0
        %v1183 = vadd.f32 %v1167, 1.0
        %v1184 = vadd.f32 %v1168, 1.0
        %v1185 = vadd.f32 %v1169, 1.0
        %v1186 = vadd.f32 %v1170, 1.0
        %v1187 = vadd.f32 %v1171, 1.0
        %v1188 = vadd.f32 %v1172, 1.0
        %v1189 = vadd.f32 %v1173, 1.0
        %v1190 = vmul.f32 %v1062, %v1174
        %v1191 = vmul.f32 %v1063, %v1175
        %v1192 = vmul.f32 %v1064, %v1176
        %v1193 = vmul.f32 %v1065, %v1177
        %v1194 = vmul.f32 %v1066, %v1178
        %v1195 = vmul.f32 %v1067, %v1179
        %v1196 = vmul.f32 %v1068, %v1180
        %v1197 = vmul.f32 %v1069, %v1181
        %v1198 = vmul.f32 %v1070, %v1182
        %v1199 = vmul.f32 %v1071, %v1183
        %v1200 = vmul.f32 %v1072, %v1184
        %v1201 = vmul.f32 %v1073, %v1185
        %v1202 = vmul.f32 %v1074, %v1186
        %v1203 = vmul.f32 %v1075, %v1187
        %v1204 = vmul.f32 %v1076, %v1188
        %v1205 = vmul.f32 %v1077, %v1189
        %v1206 = vld [vmem:[#allocation2] sm:$0x1]
        %v1207 = vadd.f32 %v1190, %v1191
        %v1208 = vadd.f32 %v1207, %v1192
        %v1209 = vadd.f32 %v1208, %v1193
        %v1210 = vadd.f32 %v1209, %v1194
        %v1211 = vadd.f32 %v1210, %v1195
        %v1212 = vadd.f32 %v1211, %v1196
        %v1213 = vadd.f32 %v1212, %v1197
        %v1214 = vadd.f32 %v1213, %v1198
        %v1215 = vadd.f32 %v1214, %v1199
        %v1216 = vadd.f32 %v1215, %v1200
        %v1217 = vadd.f32 %v1216, %v1201
        %v1218 = vadd.f32 %v1217, %v1202
        %v1219 = vadd.f32 %v1218, %v1203
        %v1220 = vadd.f32 %v1219, %v1204
        %v1221 = vadd.f32 %v1220, %v1205
        %v1222 = vrot.slane %v1221, 4
        %v1223 = vadd.f32 %v1221, %v1222
        %v1224 = vrot.slane %v1223, 2
        %v1225 = vadd.f32 %v1223, %v1224
        %v1226 = vrot.slane %v1225, 1
        %v1227 = vadd.f32 %v1225, %v1226
        %v1228 = vadd.f32 %v1206, %v1227
        %1229 = vst [vmem:[#allocation2] sm:$0x1] %v1228
        %p1230 = scmp.eq.s32.totalorder %s30, 1
        // Predicated region
        $region69: #{tpu_custom_call.1} parent=63 // pred_check
          %p1231 = pneg %p1230
        $region70: #{tpu_custom_call.1} parent=63 // pred_check_branch
          %1233 = sbr.rel (%p1231) target = $region72
        $region71: #{tpu_custom_call.1} parent=63 // pred_region
          %v1234 = vld [vmem:[#allocation2] sm:$0x1]
          %v1235 = vmul.f32 %v1234, 0.00390625
          %v1236 = vpack.c.bf16 %v1235, %v1235
          %v1237 = vld [vmem:[%s4] sm:$0xf]
          %v1238 = vld [vmem:[%s4 + $0x4] sm:$0xf]
          %v1239 = vld [vmem:[%s4 + $0x8] sm:$0xf]
          %v1240 = vld [vmem:[%s4 + $0xc] sm:$0xf]
          %v1241 = vld [vmem:[%s4 + $0x10] sm:$0xf]
          %v1242 = vld [vmem:[%s4 + $0x14] sm:$0xf]
          %v1243 = vld [vmem:[%s4 + $0x18] sm:$0xf]
          %v1244 = vld [vmem:[%s4 + $0x1c] sm:$0xf]
          %v1245 = vld [vmem:[%s4 + $0x20] sm:$0xf]
          %v1246 = vld [vmem:[%s4 + $0x24] sm:$0xf]
          %v1247 = vld [vmem:[%s4 + $0x28] sm:$0xf]
          %v1248 = vld [vmem:[%s4 + $0x2c] sm:$0xf]
          %v1249 = vld [vmem:[%s4 + $0x30] sm:$0xf]
          %v1250 = vld [vmem:[%s4 + $0x34] sm:$0xf]
          %v1251 = vld [vmem:[%s4 + $0x38] sm:$0xf]
          %v1252 = vld [vmem:[%s4 + $0x3c] sm:$0xf]
          %v1253 = vld [vmem:[%s409] sm:$0x1]
          %v1254 = vpack.c.bf16 %v1253, %v1253
          %v1255 = vld [vmem:[%s5] sm:$0xf]
          %vm1256 = vcmask 64512
          %v1258 = vsel %vm1256, %v1254, 0
          %vm1260 = vcmask 1043456
          %v1262 = vsel %vm1260, %v1255, 0
          %1264 = vmatprep.subr.bf16.mxu0 0
          %1265 = vmatpush1.bf16.msra.mxu0 0
          %1266 = vmatprep.subr.bf16.mxu0 0
          %1267 = vmatpush1.bf16.msra.mxu0 0
          %1268 = vmatprep.subr.bf16.mxu0 0
          %1269 = vmatpush1.bf16.msra.mxu0 0
          %1270 = vmatprep.subr.bf16.mxu0 0
          %1271 = vmatpush1.bf16.msra.mxu0 0
          %1272 = vmatprep.subr.bf16.mxu0 0
          %1273 = vmatpush1.bf16.msra.mxu0 0
          %1274 = vmatprep.subr.bf16.mxu0 0
          %1275 = vmatpush1.bf16.msra.mxu0 0
          %1276 = vmatprep.subr.bf16.mxu0 0
          %1277 = vmatpush1.bf16.msra.mxu0 0
          %1278 = vmatprep.subr.bf16.mxu0 0
          %1279 = vmatpush1.bf16.msra.mxu0 %v1262
          %1280 = vmatprep.subr.bf16.mxu0 0
          %1281 = vmatpush2.bf16.msra.mxu0 0
          %1282 = vmatprep.subr.bf16.mxu0 0
          %1283 = vmatpush2.bf16.msra.mxu0 0
          %1284 = vmatprep.subr.bf16.mxu0 0
          %1285 = vmatpush2.bf16.msra.mxu0 0
          %1286 = vmatprep.subr.bf16.mxu0 0
          %1287 = vmatpush2.bf16.msra.mxu0 0
          %1288 = vmatprep.subr.bf16.mxu0 0
          %1289 = vmatpush2.bf16.msra.mxu0 0
          %1290 = vmatprep.subr.bf16.mxu0 0
          %1291 = vmatpush2.bf16.msra.mxu0 0
          %1292 = vmatprep.subr.bf16.mxu0 0
          %1293 = vmatpush2.bf16.msra.mxu0 0
          %1294 = vmatprep.subr.bf16.mxu0 0
          %1295 = vmatpush2.bf16.msra.mxu0 0
          %1296 = vmatprep.mubr.bf16.mxu0 0
          %1297 = vmatmul.mubr.bf16.gmra.mxu0 %v1258
          %v1298 = vpop.f32.mrf.mxu0
          %v1299 = vadd.f32 0.0, %v1298
          %v1300 = vpop.f32.mrf.mxu0
          %v1301 = vpop.f32.mrf.mxu0
          %v1302 = vpop.f32.mrf.mxu0
          %1303 = vdwg.mxu0
          %v1320 = vunpack.c.l.b16 %v1237
          %v1321 = vunpack.c.l.b16 %v1238
          %v1322 = vunpack.c.l.b16 %v1239
          %v1323 = vunpack.c.l.b16 %v1240
          %v1324 = vunpack.c.l.b16 %v1241
          %v1325 = vunpack.c.l.b16 %v1242
          %v1326 = vunpack.c.l.b16 %v1243
          %v1327 = vunpack.c.l.b16 %v1244
          %v1328 = vunpack.c.l.b16 %v1245
          %v1329 = vunpack.c.l.b16 %v1246
          %v1330 = vunpack.c.l.b16 %v1247
          %v1331 = vunpack.c.l.b16 %v1248
          %v1332 = vunpack.c.l.b16 %v1249
          %v1333 = vunpack.c.l.b16 %v1250
          %v1334 = vunpack.c.l.b16 %v1251
          %v1335 = vunpack.c.l.b16 %v1252
          %v1336 = vpack.c.b16 %v1321, %v1320
          %v1337 = vpack.c.b16 %v1323, %v1322
          %v1338 = vpack.c.b16 %v1325, %v1324
          %v1339 = vpack.c.b16 %v1327, %v1326
          %v1340 = vpack.c.b16 %v1329, %v1328
          %v1341 = vpack.c.b16 %v1331, %v1330
          %v1342 = vpack.c.b16 %v1333, %v1332
          %v1343 = vpack.c.b16 %v1335, %v1334
          %1352 = vmatprep.subr.bf16.mxu0 0
          %1353 = vmatpush1.bf16.msra.mxu0 %v1343
          %1354 = vmatprep.subr.bf16.mxu0 0
          %1355 = vmatpush1.bf16.msra.mxu0 %v1342
          %1356 = vmatprep.subr.bf16.mxu0 0
          %1357 = vmatpush1.bf16.msra.mxu0 %v1341
          %1358 = vmatprep.subr.bf16.mxu0 0
          %1359 = vmatpush1.bf16.msra.mxu0 %v1340
          %1360 = vmatprep.subr.bf16.mxu0 0
          %1361 = vmatpush1.bf16.msra.mxu0 %v1339
          %1362 = vmatprep.subr.bf16.mxu0 0
          %1363 = vmatpush1.bf16.msra.mxu0 %v1338
          %1364 = vmatprep.subr.bf16.mxu0 0
          %1365 = vmatpush1.bf16.msra.mxu0 %v1337
          %1366 = vmatprep.subr.bf16.mxu0 0
          %1367 = vmatpush1.bf16.msra.mxu0 %v1336
          %1368 = vmatprep.subr.bf16.mxu0 0
          %1369 = vmatpush2.bf16.msra.mxu0 0
          %1370 = vmatprep.subr.bf16.mxu0 0
          %1371 = vmatpush2.bf16.msra.mxu0 0
          %1372 = vmatprep.subr.bf16.mxu0 0
          %1373 = vmatpush2.bf16.msra.mxu0 0
          %1374 = vmatprep.subr.bf16.mxu0 0
          %1375 = vmatpush2.bf16.msra.mxu0 0
          %1376 = vmatprep.subr.bf16.mxu0 0
          %1377 = vmatpush2.bf16.msra.mxu0 0
          %1378 = vmatprep.subr.bf16.mxu0 0
          %1379 = vmatpush2.bf16.msra.mxu0 0
          %1380 = vmatprep.subr.bf16.mxu0 0
          %1381 = vmatpush2.bf16.msra.mxu0 0
          %1382 = vmatprep.subr.bf16.mxu0 0
          %1383 = vmatpush2.bf16.msra.mxu0 0
          %1384 = vmatprep.mubr.bf16.mxu0 0
          %1385 = vmatmul.mubr.bf16.gmra.mxu0 %v1236
          %v1386 = vpop.f32.mrf.mxu0
          %v1387 = vadd.f32 %v1299, %v1386
          %v1388 = vpop.f32.mrf.mxu0
          %v1389 = vpop.f32.mrf.mxu0
          %v1390 = vpop.f32.mrf.mxu0
          %1391 = vdwg.mxu0
          %v1392 = vld [vmem:[%s6] sm:$0x1]
          %v1393 = vadd.f32 %v1387, %v1392
          %v1394 = vmul.f32 %v1393, 0.5
          %v1395 = vmul.f32 %v1393, 0.044715
          %v1396 = vmul.f32 %v1395, %v1393
          %v1397 = vmul.f32 %v1396, %v1393
          %v1398 = vadd.f32 %v1393, %v1397
          %v1399 = vmul.f32 %v1398, 0.7978846
          %v1400 = vtanh.pop %v1399
          %v1401 = vadd.f32 %v1400, 1.0
          %v1402 = vmul.f32 %v1394, %v1401
          %v1403 = vpack.c.bf16 %v1402, %v1402
          %v1404 = vld [vmem:[%s7] sm:$0xf]
          %v1405 = vld [vmem:[%s7 + $0x4] sm:$0xf]
          %v1406 = vld [vmem:[%s7 + $0x8] sm:$0xf]
          %v1407 = vld [vmem:[%s7 + $0xc] sm:$0xf]
          %v1408 = vld [vmem:[%s7 + $0x10] sm:$0xf]
          %v1409 = vld [vmem:[%s7 + $0x14] sm:$0xf]
          %v1410 = vld [vmem:[%s7 + $0x18] sm:$0xf]
          %v1411 = vld [vmem:[%s7 + $0x1c] sm:$0xf]
          %v1412 = vld [vmem:[%s7 + $0x20] sm:$0xf]
          %v1413 = vld [vmem:[%s7 + $0x24] sm:$0xf]
          %v1414 = vld [vmem:[%s7 + $0x28] sm:$0xf]
          %v1415 = vld [vmem:[%s7 + $0x2c] sm:$0xf]
          %v1416 = vld [vmem:[%s7 + $0x30] sm:$0xf]
          %v1417 = vld [vmem:[%s7 + $0x34] sm:$0xf]
          %v1418 = vld [vmem:[%s7 + $0x38] sm:$0xf]
          %v1419 = vld [vmem:[%s7 + $0x3c] sm:$0xf]
          %v1420 = vld [vmem:[%s8] sm:$0x1]
          %v1437 = vunpack.c.l.b16 %v1404
          %v1438 = vunpack.c.l.b16 %v1405
          %v1439 = vunpack.c.l.b16 %v1406
          %v1440 = vunpack.c.l.b16 %v1407
          %v1441 = vunpack.c.l.b16 %v1408
          %v1442 = vunpack.c.l.b16 %v1409
          %v1443 = vunpack.c.l.b16 %v1410
          %v1444 = vunpack.c.l.b16 %v1411
          %v1445 = vunpack.c.l.b16 %v1412
          %v1446 = vunpack.c.l.b16 %v1413
          %v1447 = vunpack.c.l.b16 %v1414
          %v1448 = vunpack.c.l.b16 %v1415
          %v1449 = vunpack.c.l.b16 %v1416
          %v1450 = vunpack.c.l.b16 %v1417
          %v1451 = vunpack.c.l.b16 %v1418
          %v1452 = vunpack.c.l.b16 %v1419
          %v1453 = vpack.c.b16 %v1438, %v1437
          %v1454 = vpack.c.b16 %v1440, %v1439
          %v1455 = vpack.c.b16 %v1442, %v1441
          %v1456 = vpack.c.b16 %v1444, %v1443
          %v1457 = vpack.c.b16 %v1446, %v1445
          %v1458 = vpack.c.b16 %v1448, %v1447
          %v1459 = vpack.c.b16 %v1450, %v1449
          %v1460 = vpack.c.b16 %v1452, %v1451
          %1469 = vmatprep.subr.bf16.mxu0 0
          %1470 = vmatpush1.bf16.msra.mxu0 %v1460
          %1471 = vmatprep.subr.bf16.mxu0 0
          %1472 = vmatpush1.bf16.msra.mxu0 %v1459
          %1473 = vmatprep.subr.bf16.mxu0 0
          %1474 = vmatpush1.bf16.msra.mxu0 %v1458
          %1475 = vmatprep.subr.bf16.mxu0 0
          %1476 = vmatpush1.bf16.msra.mxu0 %v1457
          %1477 = vmatprep.subr.bf16.mxu0 0
          %1478 = vmatpush1.bf16.msra.mxu0 %v1456
          %1479 = vmatprep.subr.bf16.mxu0 0
          %1480 = vmatpush1.bf16.msra.mxu0 %v1455
          %1481 = vmatprep.subr.bf16.mxu0 0
          %1482 = vmatpush1.bf16.msra.mxu0 %v1454
          %1483 = vmatprep.subr.bf16.mxu0 0
          %1484 = vmatpush1.bf16.msra.mxu0 %v1453
          %1485 = vmatprep.subr.bf16.mxu0 0
          %1486 = vmatpush2.bf16.msra.mxu0 0
          %1487 = vmatprep.subr.bf16.mxu0 0
          %1488 = vmatpush2.bf16.msra.mxu0 0
          %1489 = vmatprep.subr.bf16.mxu0 0
          %1490 = vmatpush2.bf16.msra.mxu0 0
          %1491 = vmatprep.subr.bf16.mxu0 0
          %1492 = vmatpush2.bf16.msra.mxu0 0
          %1493 = vmatprep.subr.bf16.mxu0 0
          %1494 = vmatpush2.bf16.msra.mxu0 0
          %1495 = vmatprep.subr.bf16.mxu0 0
          %1496 = vmatpush2.bf16.msra.mxu0 0
          %1497 = vmatprep.subr.bf16.mxu0 0
          %1498 = vmatpush2.bf16.msra.mxu0 0
          %1499 = vmatprep.subr.bf16.mxu0 0
          %1500 = vmatpush2.bf16.msra.mxu0 0
          %1501 = vmatprep.mubr.bf16.mxu0 0
          %1502 = vmatmul.mubr.bf16.gmra.mxu0 %v1403
          %v1503 = vpop.f32.mrf.mxu0
          %v1504 = vadd.f32 %v1420, %v1503
          %v1505 = vpop.f32.mrf.mxu0
          %v1506 = vpop.f32.mrf.mxu0
          %v1507 = vpop.f32.mrf.mxu0
          %1508 = vdwg.mxu0
          %v1509 = vpack.c.bf16 %v1504, %v1504
          %v1510 = vld [vmem:[%s9] sm:$0xf]
          %v1511 = vld [vmem:[%s9 + $0x4] sm:$0xf]
          %v1512 = vld [vmem:[%s9 + $0x8] sm:$0xf]
          %v1513 = vld [vmem:[%s9 + $0xc] sm:$0xf]
          %v1514 = vld [vmem:[%s9 + $0x10] sm:$0xf]
          %v1515 = vld [vmem:[%s9 + $0x14] sm:$0xf]
          %v1516 = vld [vmem:[%s9 + $0x18] sm:$0xf]
          %v1517 = vld [vmem:[%s9 + $0x1c] sm:$0xf]
          %v1518 = vld [vmem:[%s9 + $0x20] sm:$0xf]
          %v1519 = vld [vmem:[%s9 + $0x24] sm:$0xf]
          %v1520 = vld [vmem:[%s9 + $0x28] sm:$0xf]
          %v1521 = vld [vmem:[%s9 + $0x2c] sm:$0xf]
          %v1522 = vld [vmem:[%s9 + $0x30] sm:$0xf]
          %v1523 = vld [vmem:[%s9 + $0x34] sm:$0xf]
          %v1524 = vld [vmem:[%s9 + $0x38] sm:$0xf]
          %v1525 = vld [vmem:[%s9 + $0x3c] sm:$0xf]
          %v1526 = vld [vmem:[%s10] sm:$0x1]
          %v1543 = vunpack.c.l.b16 %v1510
          %v1544 = vunpack.c.l.b16 %v1511
          %v1545 = vunpack.c.l.b16 %v1512
          %v1546 = vunpack.c.l.b16 %v1513
          %v1547 = vunpack.c.l.b16 %v1514
          %v1548 = vunpack.c.l.b16 %v1515
          %v1549 = vunpack.c.l.b16 %v1516
          %v1550 = vunpack.c.l.b16 %v1517
          %v1551 = vunpack.c.l.b16 %v1518
          %v1552 = vunpack.c.l.b16 %v1519
          %v1553 = vunpack.c.l.b16 %v1520
          %v1554 = vunpack.c.l.b16 %v1521
          %v1555 = vunpack.c.l.b16 %v1522
          %v1556 = vunpack.c.l.b16 %v1523
          %v1557 = vunpack.c.l.b16 %v1524
          %v1558 = vunpack.c.l.b16 %v1525
          %v1559 = vpack.c.b16 %v1544, %v1543
          %v1560 = vpack.c.b16 %v1546, %v1545
          %v1561 = vpack.c.b16 %v1548, %v1547
          %v1562 = vpack.c.b16 %v1550, %v1549
          %v1563 = vpack.c.b16 %v1552, %v1551
          %v1564 = vpack.c.b16 %v1554, %v1553
          %v1565 = vpack.c.b16 %v1556, %v1555
          %v1566 = vpack.c.b16 %v1558, %v1557
          %1575 = vmatprep.subr.bf16.mxu0 0
          %1576 = vmatpush1.bf16.msra.mxu0 %v1566
          %1577 = vmatprep.subr.bf16.mxu0 0
          %1578 = vmatpush1.bf16.msra.mxu0 %v1565
          %1579 = vmatprep.subr.bf16.mxu0 0
          %1580 = vmatpush1.bf16.msra.mxu0 %v1564
          %1581 = vmatprep.subr.bf16.mxu0 0
          %1582 = vmatpush1.bf16.msra.mxu0 %v1563
          %1583 = vmatprep.subr.bf16.mxu0 0
          %1584 = vmatpush1.bf16.msra.mxu0 %v1562
          %1585 = vmatprep.subr.bf16.mxu0 0
          %1586 = vmatpush1.bf16.msra.mxu0 %v1561
          %1587 = vmatprep.subr.bf16.mxu0 0
          %1588 = vmatpush1.bf16.msra.mxu0 %v1560
          %1589 = vmatprep.subr.bf16.mxu0 0
          %1590 = vmatpush1.bf16.msra.mxu0 %v1559
          %1591 = vmatprep.subr.bf16.mxu0 0
          %1592 = vmatpush2.bf16.msra.mxu0 0
          %1593 = vmatprep.subr.bf16.mxu0 0
          %1594 = vmatpush2.bf16.msra.mxu0 0
          %1595 = vmatprep.subr.bf16.mxu0 0
          %1596 = vmatpush2.bf16.msra.mxu0 0
          %1597 = vmatprep.subr.bf16.mxu0 0
          %1598 = vmatpush2.bf16.msra.mxu0 0
          %1599 = vmatprep.subr.bf16.mxu0 0
          %1600 = vmatpush2.bf16.msra.mxu0 0
          %1601 = vmatprep.subr.bf16.mxu0 0
          %1602 = vmatpush2.bf16.msra.mxu0 0
          %1603 = vmatprep.subr.bf16.mxu0 0
          %1604 = vmatpush2.bf16.msra.mxu0 0
          %1605 = vmatprep.subr.bf16.mxu0 0
          %1606 = vmatpush2.bf16.msra.mxu0 0
          %1607 = vmatprep.mubr.bf16.mxu0 0
          %1608 = vmatmul.mubr.bf16.gmra.mxu0 %v1509
          %v1609 = vpop.f32.mrf.mxu0
          %v1610 = vadd.f32 %v1526, %v1609
          %v1611 = vpop.f32.mrf.mxu0
          %v1612 = vpop.f32.mrf.mxu0
          %v1613 = vpop.f32.mrf.mxu0
          %1614 = vdwg.mxu0
          %1615 = vst [vmem:[%s401] sm:$0x1] %v1610
        $region72: #{tpu_custom_call.1} parent=63 // pred_fallthru
          _
        %s1616 = sand.u32 %s286, 1
        %s1617 = scalar_lea.sflag [#allocation4], %s1616
        %s1618 = sand.u32 %s286, 1
        %s1619 = scalar_lea.vmem [#allocation3], %s1618
        // Predicated region
        $region73: #{tpu_custom_call.1} parent=63 // pred_check
          %p1620 = pneg %p296
        $region74: #{tpu_custom_call.1} parent=63 // pred_check_branch
          %1622 = sbr.rel (%p1620) target = $region76
        $region75: #{tpu_custom_call.1} parent=63 // pred_region
          %s1624 = ssub.s32 16, 16
          %1625 = vsyncadd %s1617, %s1624
          %s1626 = smul.addr %s29, 16
          %s1627 = scalar_lea.hbm %s11, %s1626
          %s1629 = sshll.u32 %s1619, 4
          %s1630 = int_to_ptr.vmem [resolvable:$true] %s1629
          %1632 = dma.vmem_to_hbm [thread:$0]  %s1630, 16, %s1627, %s1617
        $region76: #{tpu_custom_call.1} parent=63 // pred_fallthru
          _
      $region64: #{tpu_custom_call.1} parent=5 // pred_fallthru
        _
      %p1633 = scmp.le.s32.totalorder 2, %s20
      // Predicated region
      $region77: #{tpu_custom_call.1} parent=5 // pred_check
        %p1634 = pneg %p1633
      $region78: #{tpu_custom_call.1} parent=5 // pred_check_branch
        %1636 = sbr.rel (%p1634) target = $region80
      $region79: #{tpu_custom_call.1} parent=5 // pred_region
        %s1637 = ssub.s32 %s20, 2
        // Predicated region
        $region81: #{tpu_custom_call.1} parent=79 // pred_check
          %p1638 = pneg %p302
        $region82: #{tpu_custom_call.1} parent=79 // pred_check_branch
          %1640 = sbr.rel (%p1638) target = $region84
        $region83: #{tpu_custom_call.1} parent=79 // pred_region
          %s1641 = sand.u32 %s287, 1
          %s1642 = scalar_lea.sflag [#allocation4], %s1641
          %s1643 = sand.u32 %s287, 1
          %s1644 = scalar_lea.vmem [#allocation3], %s1643
          %1645 = dma.done %s1642, 16
        $region84: #{tpu_custom_call.1} parent=79 // pred_fallthru
          _
      $region80: #{tpu_custom_call.1} parent=5 // pred_fallthru
        _
    $region6: #{tpu_custom_call.1} parent=1 // loop_footer
      %s24 = sadd.s32 1, %s20
    $region7: #{tpu_custom_call.1} parent=1 // loop_footer_branch
      %19 = sbr.rel target = $region3
    $region8: #{tpu_custom_call.1} parent=1 // loop_exit
      _
    %1646 = vsyncpa [#allocation4], 1
    %s1647 = scalar_lea.sflag [#allocation4], 1
    %1648 = vsyncpa %s1647, 1

</llo_original>
